<compile_context>
chip_gen: v7x
topology: tpu7x:2x2x1
jax: 0.10.0
libtpu: 0.0.40
codegen_flags: <defaults>
</compile_context>

<pallas_src>
import functools

import jax
import jax.numpy as jnp
from jax.experimental import pallas as pl
from jax.experimental.pallas import tpu as pltpu

LN_EPS = 1e-12  # HF BeitConfig.layer_norm_eps


def _layernorm(v, g, b):
    mu = jnp.mean(v, axis=-1, keepdims=True)
    var = jnp.mean((v - mu) ** 2, axis=-1, keepdims=True)
    return (v - mu) * jax.lax.rsqrt(var + LN_EPS) * g + b


def _gelu(x):
    # TODO(synk): HF BEiT uses erf-exact GELU; tanh approximation used here for
    # guaranteed Mosaic lowering (~1e-3 relative difference per layer).
    return jax.nn.gelu(x, approximate=True)


def beit_encoder_kernel(
    x_ref,                                   # (Bb, S, D)  input batch block
    ln1_g_ref, ln1_b_ref,                    # (1, 1, D)
    wqkv_ref, bqkv_ref,                      # (1, D, 3D) / (1, 1, 3D)
    wo_ref, bo_ref, lam1_ref,                # (1, D, D) / (1, 1, D) / (1, 1, D)
    ln2_g_ref, ln2_b_ref,                    # (1, 1, D)
    w1_ref, b1_ref, w2_ref, b2_ref, lam2_ref,
    out_ref,                                 # (Bb, S, D)  carried activations
    *, num_heads, seq_len, batch_block,
):
    l = pl.program_id(1)                     # layer index (last / "arbitrary" axis)
    H, S, Bb = num_heads, seq_len, batch_block

    # Layer 0: seed the carried activations held in the resident output block.
    @pl.when(l == 0)
    def _():
        out_ref[...] = x_ref[...]

    cdt = wqkv_ref.dtype                     # matmul compute dtype (bf16)
    xb = out_ref[...].astype(jnp.float32)    # (Bb, S, D)
    D = xb.shape[-1]
    dh = D // H

    # Flatten the batch block into GEMM rows (sublane concat; cheap for S % 8 == 0).
    x2d = jnp.concatenate([xb[b] for b in range(Bb)], axis=0)          # (Bb*S, D)

    # ---- self-attention block -----------------------------------------------
    xn = _layernorm(x2d, ln1_g_ref[0], ln1_b_ref[0])
    qkv = jnp.dot(xn.astype(cdt), wqkv_ref[0],
                  preferred_element_type=jnp.float32) + bqkv_ref[0]    # (Bb*S, 3D)
    # NOTE: 1/sqrt(dh) is pre-folded into the Q columns of wqkv/bqkv.
    qkv = qkv.astype(cdt)                    # cast ONCE before head slicing
    q = qkv[:, 0:D]
    k = qkv[:, D:2 * D]
    v = qkv[:, 2 * D:3 * D]

    # Head split per (batch element, head) -> (Bb*H, S, dh) batched attention
    # (lane slices + stack; avoids 3-D transposes that move the sublane dim).
    def _heads(t):
        return jnp.stack([t[b * S:(b + 1) * S, h * dh:(h + 1) * dh]
                          for b in range(Bb) for h in range(H)], axis=0)

    qh, kh, vh = _heads(q), _heads(k), _heads(v)

    scores = jnp.einsum('nqd,nkd->nqk', qh, kh,
                        preferred_element_type=jnp.float32)            # (Bb*H, S, S)
    scores = scores - jnp.max(scores, axis=-1, keepdims=True)
    p = jnp.exp(scores)
    p = p * pl.reciprocal(jnp.sum(p, axis=-1, keepdims=True), approx=True)
    ctx = jnp.einsum('nqk,nkd->nqd', p.astype(cdt), vh,
                     preferred_element_type=jnp.float32)               # (Bb*H, S, dh)

    # Merge heads back to (Bb*S, D) and do ONE K=D output projection.
    ctx2d = jnp.concatenate(
        [jnp.concatenate([ctx[b * H + h] for h in range(H)], axis=-1)
         for b in range(Bb)], axis=0)                                  # (Bb*S, D)
    attn = jnp.dot(ctx2d.astype(cdt), wo_ref[0],
                   preferred_element_type=jnp.float32) + bo_ref[0]
    x1 = x2d + lam1_ref[0] * attn            # layer-scale residual

    # ---- MLP block ------------------------------------------------------------
    xn2 = _layernorm(x1, ln2_g_ref[0], ln2_b_ref[0])
    h1 = _gelu(jnp.dot(xn2.astype(cdt), w1_ref[0],
                       preferred_element_type=jnp.float32) + b1_ref[0])
    h2 = jnp.dot(h1.astype(cdt), w2_ref[0],
                 preferred_element_type=jnp.float32) + b2_ref[0]
    y2d = x1 + lam2_ref[0] * h2                                        # (Bb*S, D)

    # Un-flatten back to (Bb, S, D) and store the carry / final output.
    out_ref[...] = jnp.stack([y2d[b * S:(b + 1) * S, :] for b in range(Bb)],
                             axis=0).astype(out_ref.dtype)


def _vmem_capacity_bytes():
    try:
        cap = getattr(pltpu.get_tpu_info(), "vmem_capacity_bytes", None)
        if cap:
            return int(cap)
    except Exception:
        pass
    return 64 * 2**20  # conservative fallback (v7x physical size)


def _pick_batch_block(B, requested=None, max_bb=8):
    # Largest divisor of B not exceeding max_bb.  (On v7x keep it small enough
    # that B // bb >= 2 so the "parallel" batch axis can shard across both TCs.)
    if requested is not None:
        assert B % requested == 0, "batch_block must divide batch size"
        return requested
    bb = 1
    for cand in range(1, min(B, max_bb) + 1):
        if B % cand == 0:
            bb = cand
    return bb


def modified_beit_forward(x, stacked_params, num_heads, batch_block=None,
                          resolution=None):
    """Equivalent of ModifiedBEiT.forward: returns encoder last_hidden_state.

    `resolution` is accepted for API parity but unused: with the default
    BeitConfig there is no (window) relative position bias to interpolate.
    """
    del resolution
    B, S, D = x.shape
    assert D % num_heads == 0
    L = stacked_params[0].shape[0]
    Dff = stacked_params[10].shape[-1]          # w1 stacked as (L, D, Dff)
    bb = _pick_batch_block(B, batch_block)
    H = num_heads

    x_spec = pl.BlockSpec((bb, S, D), lambda b, l: (b, 0, 0))
    out_spec = pl.BlockSpec((bb, S, D), lambda b, l: (b, 0, 0))
    # Per-layer weight slabs: leading L axis indexed by the layer grid axis so
    # layer l+1's weights prefetch (double-buffered) while layer l computes.
    param_specs = [pl.BlockSpec((1,) + p.shape[1:], lambda b, l: (l, 0, 0))
                   for p in stacked_params]

    # VMEM budget: 2x per-layer weight buffers (pipeline) + in/out blocks +
    # f32/bf16 intermediates + headroom, capped below this chip's physical VMEM.
    per_layer_param_bytes = sum(
        (int(p.size) // L) * p.dtype.itemsize for p in stacked_params)
    block_bytes = bb * S * D * x.dtype.itemsize
    M = bb * S
    inter_bytes = (4 * (3 * M * D + 2 * bb * H * S * S + M * Dff + 6 * M * D)
                   + 2 * (3 * M * D + M * Dff + M * D))
    needed = 2 * per_layer_param_bytes + 4 * block_bytes + inter_bytes + (8 << 20)
    cap = _vmem_capacity_bytes()
    vmem_limit = int(min(cap - (8 << 20), max(32 << 20, needed)))

    kernel = functools.partial(beit_encoder_kernel, num_heads=num_heads,
                               seq_len=S, batch_block=bb)

    return pl.pallas_call(
        kernel,
        out_shape=jax.ShapeDtypeStruct((B, S, D), x.dtype),
        grid=(B // bb, L),
        in_specs=[x_spec] + param_specs,
        out_specs=out_spec,
        compiler_params=pltpu.CompilerParams(
            dimension_semantics=("parallel", "arbitrary"),
            vmem_limit_bytes=vmem_limit),
    )(x, *stacked_params)


# ------------------------------ parameter init & packing ---------------------
def init_layer_params(key, D, Dff):
    """Raw HF-BEiT-style per-layer parameters (all f32)."""
    ks = jax.random.split(key, 10)
    s = 0.02
    ln1_g = jnp.ones((1, D), jnp.float32)
    ln1_b = jnp.zeros((1, D), jnp.float32)
    wq = s * jax.random.normal(ks[0], (D, D), jnp.float32)
    bq = s * jax.random.normal(ks[1], (1, D), jnp.float32)
    wk = s * jax.random.normal(ks[2], (D, D), jnp.float32)   # no key bias in BEiT
    wv = s * jax.random.normal(ks[3], (D, D), jnp.float32)
    bv = s * jax.random.normal(ks[4], (1, D), jnp.float32)
    wo = s * jax.random.normal(ks[5], (D, D), jnp.float32)
    bo = s * jax.random.normal(ks[6], (1, D), jnp.float32)
    lam1 = 0.1 * jnp.ones((1, D), jnp.float32)               # layer_scale_init_value
    ln2_g = jnp.ones((1, D), jnp.float32)
    ln2_b = jnp.zeros((1, D), jnp.float32)
    w1 = s * jax.random.normal(ks[7], (D, Dff), jnp.float32)
    b1 = s * jax.random.normal(ks[8], (1, Dff), jnp.float32)
    w2 = s * jax.random.normal(ks[9], (Dff, D), jnp.float32)
    b2 = jnp.zeros((1, D), jnp.float32)
    lam2 = 0.1 * jnp.ones((1, D), jnp.float32)
    return (ln1_g, ln1_b, wq, bq, wk, wv, bv, wo, bo, lam1,
            ln2_g, ln2_b, w1, b1, w2, b2, lam2)


def pack_layer_params(raw, num_heads, compute_dtype=jnp.bfloat16):
    """Fuse Q/K/V, fold the 1/sqrt(dh) attention scale into Q, cast to bf16."""
    (ln1_g, ln1_b, wq, bq, wk, wv, bv, wo, bo, lam1,
     ln2_g, ln2_b, w1, b1, w2, b2, lam2) = raw
    D = wq.shape[0]
    scale = (D // num_heads) ** -0.5
    wqkv = jnp.concatenate([wq * scale, wk, wv], axis=1).astype(compute_dtype)   # (D, 3D)
    bqkv = jnp.concatenate([bq * scale, jnp.zeros_like(bq), bv], axis=1)         # key bias = 0
    return (ln1_g, ln1_b, wqkv, bqkv,
            wo.astype(compute_dtype), bo, lam1,
            ln2_g, ln2_b,
            w1.astype(compute_dtype), b1,
            w2.astype(compute_dtype), b2, lam2)


def stack_layer_params(packed_list):
    """Stack per-layer packed params along a leading L axis for the layer grid."""
    n = len(packed_list[0])
    return tuple(jnp.stack([lp[i] for lp in packed_list], axis=0) for i in range(n))


# ----------------------- pure-JAX reference (for sanity) ---------------------
def _layer_ref_one(xb, pp, num_heads):
    (ln1_g, ln1_b, wqkv, bqkv, wo, bo, lam1,
     ln2_g, ln2_b, w1, b1, w2, b2, lam2) = pp
    S, D = xb.shape
    H = num_heads
    dh = D // H
    cdt = wqkv.dtype

    xn = _layernorm(xb, ln1_g, ln1_b)
    qkv = (jnp.dot(xn.astype(cdt), wqkv, preferred_element_type=jnp.float32)
           + bqkv).astype(cdt)
    q, k, v = qkv[:, 0:D], qkv[:, D:2 * D], qkv[:, 2 * D:3 * D]

    qh = q.reshape(S, H, dh).transpose(1, 0, 2)
    kh = k.reshape(S, H, dh).transpose(1, 0, 2)
    vh = v.reshape(S, H, dh).transpose(1, 0, 2)

    scores = jnp.einsum('hqd,hkd->hqk', qh, kh, preferred_element_type=jnp.float32)
    scores = scores - jnp.max(scores, axis=-1, keepdims=True)
    p = jnp.exp(scores)
    p = p / jnp.sum(p, axis=-1, keepdims=True)
    ctx = jnp.einsum('hqk,hkd->hqd', p.astype(cdt), vh,
                     preferred_element_type=jnp.float32)
    ctx2d = ctx.transpose(1, 0, 2).reshape(S, D)

    attn = jnp.dot(ctx2d.astype(cdt), wo, preferred_element_type=jnp.float32) + bo
    x1 = xb + lam1 * attn

    xn2 = _layernorm(x1, ln2_g, ln2_b)
    h1 = _gelu(jnp.dot(xn2.astype(cdt), w1, preferred_element_type=jnp.float32) + b1)
    h2 = jnp.dot(h1.astype(cdt), w2, preferred_element_type=jnp.float32) + b2
    return x1 + lam2 * h2


def modified_beit_ref(x, packed_list, num_heads):
    h = x
    for lp in packed_list:
        h = jax.vmap(lambda xb: _layer_ref_one(xb, lp, num_heads))(h)
    return h


if __name__ == "__main__":
    # Small BEiT-like config: batch=2, seq=8 tokens, hidden=32, 4 heads,
    # MLP hidden 128, 2 encoder layers.  (Real BEiT-base: D=768 lane-aligned;
    # pad S to a multiple of 8/128 and mask padded keys in production configs.)
    B, S, D, H, DFF, NUM_LAYERS = 2, 8, 32, 4, 128, 2

    key = jax.random.PRNGKey(0)
    key_x, key_p = jax.random.split(key)
    x = jax.random.normal(key_x, (B, S, D), jnp.float32)

    layer_keys = jax.random.split(key_p, NUM_LAYERS)
    raw_params = [init_layer_params(k, D, DFF) for k in layer_keys]
    packed_params = [pack_layer_params(rp, num_heads=H) for rp in raw_params]
    stacked_params = stack_layer_params(packed_params)

    out = modified_beit_forward(x, stacked_params, num_heads=H, resolution=(4, 4))
    out = jax.block_until_ready(out)

    ref = modified_beit_ref(x, packed_params, num_heads=H)
    assert out.shape == (B, S, D)
    assert bool(jnp.all(jnp.isfinite(out)))
    max_err = float(jnp.max(jnp.abs(out - ref)))
    assert bool(jnp.allclose(out, ref, rtol=2e-3, atol=2e-3)), max_err

    print("KERNEL_OK")
</pallas_src>

<mosaic_0001>
module attributes {stable_mosaic.version = 11 : i64} {
  func.func @beit_encoder_kernel(%arg0: i32, %arg1: i32, %arg2: memref<2x8x32xf32, #tpu.memory_space<vmem>>, %arg3: memref<1x1x32xf32, #tpu.memory_space<vmem>>, %arg4: memref<1x1x32xf32, #tpu.memory_space<vmem>>, %arg5: memref<1x32x96xbf16, #tpu.memory_space<vmem>>, %arg6: memref<1x1x96xf32, #tpu.memory_space<vmem>>, %arg7: memref<1x32x32xbf16, #tpu.memory_space<vmem>>, %arg8: memref<1x1x32xf32, #tpu.memory_space<vmem>>, %arg9: memref<1x1x32xf32, #tpu.memory_space<vmem>>, %arg10: memref<1x1x32xf32, #tpu.memory_space<vmem>>, %arg11: memref<1x1x32xf32, #tpu.memory_space<vmem>>, %arg12: memref<1x32x128xbf16, #tpu.memory_space<vmem>>, %arg13: memref<1x1x128xf32, #tpu.memory_space<vmem>>, %arg14: memref<1x128x32xbf16, #tpu.memory_space<vmem>>, %arg15: memref<1x1x32xf32, #tpu.memory_space<vmem>>, %arg16: memref<1x1x32xf32, #tpu.memory_space<vmem>>, %arg17: memref<2x8x32xf32, #tpu.memory_space<vmem>>) attributes {dimension_semantics = [#tpu.dimension_semantics<parallel>, #tpu.dimension_semantics<arbitrary>], iteration_bounds = array<i64: 1, 2>, scalar_prefetch = 0 : i64, scratch_operands = 0 : i64, tpu.core_type = #tpu.core_type<tc>, window_params = [{transform_indices = @transform_0, window_bounds = array<i64: 2, 8, 32>}, {transform_indices = @transform_1, window_bounds = array<i64: 1, 1, 32>}, {transform_indices = @transform_2, window_bounds = array<i64: 1, 1, 32>}, {transform_indices = @transform_3, window_bounds = array<i64: 1, 32, 96>}, {transform_indices = @transform_4, window_bounds = array<i64: 1, 1, 96>}, {transform_indices = @transform_5, window_bounds = array<i64: 1, 32, 32>}, {transform_indices = @transform_6, window_bounds = array<i64: 1, 1, 32>}, {transform_indices = @transform_7, window_bounds = array<i64: 1, 1, 32>}, {transform_indices = @transform_8, window_bounds = array<i64: 1, 1, 32>}, {transform_indices = @transform_9, window_bounds = array<i64: 1, 1, 32>}, {transform_indices = @transform_10, window_bounds = array<i64: 1, 32, 128>}, {transform_indices = @transform_11, window_bounds = array<i64: 1, 1, 128>}, {transform_indices = @transform_12, window_bounds = array<i64: 1, 128, 32>}, {transform_indices = @transform_13, window_bounds = array<i64: 1, 1, 32>}, {transform_indices = @transform_14, window_bounds = array<i64: 1, 1, 32>}, {transform_indices = @transform_15, window_bounds = array<i64: 2, 8, 32>}]} {
    %c0_i32 = arith.constant 0 : i32
    %0 = arith.cmpi eq, %arg1, %c0_i32 : i32
    %1 = arith.extui %0 : i1 to i32
    %c0_i32_0 = arith.constant 0 : i32
    %2 = arith.cmpi ne, %1, %c0_i32_0 : i32
    scf.if %2 {
      %c0_69 = arith.constant 0 : index
      %c0_70 = arith.constant 0 : index
      %c0_71 = arith.constant 0 : index
      %209 = vector.load %arg2[%c0_69, %c0_70, %c0_71] : memref<2x8x32xf32, #tpu.memory_space<vmem>>, vector<2x8x32xf32>
      %c0_72 = arith.constant 0 : index
      %c0_73 = arith.constant 0 : index
      %c0_74 = arith.constant 0 : index
      %210 = vector.load %arg17[%c0_72, %c0_73, %c0_74] : memref<2x8x32xf32, #tpu.memory_space<vmem>>, vector<2x8x32xf32>
      tpu.vector_store %arg17[%c0_72, %c0_73, %c0_74], %209 {strides = array<i32>} : memref<2x8x32xf32, #tpu.memory_space<vmem>>, vector<2x8x32xf32>,
    } else {
    }
    %c0 = arith.constant 0 : index
    %c0_1 = arith.constant 0 : index
    %c0_2 = arith.constant 0 : index
    %3 = vector.load %arg17[%c0, %c0_1, %c0_2] : memref<2x8x32xf32, #tpu.memory_space<vmem>>, vector<2x8x32xf32>
    %4 = vector.extract_strided_slice %3 {offsets = [0, 0, 0], sizes = [1, 8, 32], strides = [1, 1, 1]} : vector<2x8x32xf32> to vector<1x8x32xf32>
    %5 = vector.shape_cast %4 : vector<1x8x32xf32> to vector<8x32xf32>
    %6 = vector.extract_strided_slice %3 {offsets = [1, 0, 0], sizes = [1, 8, 32], strides = [1, 1, 1]} : vector<2x8x32xf32> to vector<1x8x32xf32>
    %7 = vector.shape_cast %6 : vector<1x8x32xf32> to vector<8x32xf32>
    %8 = tpu.concatenate %5, %7 in 0 : vector<8x32xf32>, vector<8x32xf32> -> vector<16x32xf32>
    %c0_3 = arith.constant 0 : index
    %c0_4 = arith.constant 0 : index
    %c0_5 = arith.constant 0 : index
    %9 = vector.load %arg3[%c0_3, %c0_4, %c0_5] : memref<1x1x32xf32, #tpu.memory_space<vmem>>, vector<1x1x32xf32>
    %10 = vector.shape_cast %9 : vector<1x1x32xf32> to vector<1x32xf32>
    %c0_6 = arith.constant 0 : index
    %c0_7 = arith.constant 0 : index
    %c0_8 = arith.constant 0 : index
    %11 = vector.load %arg4[%c0_6, %c0_7, %c0_8] : memref<1x1x32xf32, #tpu.memory_space<vmem>>, vector<1x1x32xf32>
    %12 = vector.shape_cast %11 : vector<1x1x32xf32> to vector<1x32xf32>
    %cst = arith.constant dense<0.000000e+00> : vector<16xf32>
    %13 = vector.multi_reduction <add>, %8, %cst [1] : vector<16x32xf32> to vector<16xf32>
    %14 = vector.shape_cast %13 : vector<16xf32> to vector<16x1xf32>
    %cst_9 = arith.constant 3.200000e+01 : f32
    %15 = vector.broadcast %cst_9 : f32 to vector<16x1xf32>
    %16 = arith.divf %14, %15 : vector<16x1xf32>
    %17 = vector.broadcast %16 : vector<16x1xf32> to vector<16x32xf32>
    %18 = arith.subf %8, %17 : vector<16x32xf32>
    %19 = arith.mulf %18, %18 : vector<16x32xf32>
    %cst_10 = arith.constant dense<0.000000e+00> : vector<16xf32>
    %20 = vector.multi_reduction <add>, %19, %cst_10 [1] : vector<16x32xf32> to vector<16xf32>
    %21 = vector.shape_cast %20 : vector<16xf32> to vector<16x1xf32>
    %cst_11 = arith.constant 3.200000e+01 : f32
    %22 = vector.broadcast %cst_11 : f32 to vector<16x1xf32>
    %23 = arith.divf %21, %22 : vector<16x1xf32>
    %24 = vector.broadcast %16 : vector<16x1xf32> to vector<16x32xf32>
    %25 = arith.subf %8, %24 : vector<16x32xf32>
    %cst_12 = arith.constant 9.99999996E-13 : f32
    %26 = vector.broadcast %cst_12 : f32 to vector<16x1xf32>
    %27 = arith.addf %23, %26 : vector<16x1xf32>
    %28 = math.rsqrt %27 : vector<16x1xf32>
    %29 = vector.broadcast %28 : vector<16x1xf32> to vector<16x32xf32>
    %30 = arith.mulf %25, %29 : vector<16x32xf32>
    %31 = vector.broadcast %10 : vector<1x32xf32> to vector<16x32xf32>
    %32 = arith.mulf %30, %31 : vector<16x32xf32>
    %33 = vector.broadcast %12 : vector<1x32xf32> to vector<16x32xf32>
    %34 = arith.addf %32, %33 : vector<16x32xf32>
    %35 = arith.truncf %34 : vector<16x32xf32> to vector<16x32xbf16>
    %c0_13 = arith.constant 0 : index
    %c0_14 = arith.constant 0 : index
    %c0_15 = arith.constant 0 : index
    %36 = vector.load %arg5[%c0_13, %c0_14, %c0_15] : memref<1x32x96xbf16, #tpu.memory_space<vmem>>, vector<1x32x96xbf16>
    %37 = vector.shape_cast %36 : vector<1x32x96xbf16> to vector<32x96xbf16>
    %cst_16 = arith.constant dense<0.000000e+00> : vector<16x96xf32>
    %38 = tpu.matmul %35, %37, %cst_16 {dimension_numbers = #tpu.dot_dimension_numbers<[1], [0], [0], [1], [0, 0, 1, 1], [], []>} : vector<16x32xbf16>, vector<32x96xbf16>, vector<16x96xf32> -> vector<16x96xf32>
    %c0_17 = arith.constant 0 : index
    %c0_18 = arith.constant 0 : index
    %c0_19 = arith.constant 0 : index
    %39 = vector.load %arg6[%c0_17, %c0_18, %c0_19] : memref<1x1x96xf32, #tpu.memory_space<vmem>>, vector<1x1x96xf32>
    %40 = vector.shape_cast %39 : vector<1x1x96xf32> to vector<1x96xf32>
    %41 = vector.broadcast %40 : vector<1x96xf32> to vector<16x96xf32>
    %42 = arith.addf %38, %41 : vector<16x96xf32>
    %43 = arith.truncf %42 : vector<16x96xf32> to vector<16x96xbf16>
    %44 = vector.extract_strided_slice %43 {offsets = [0, 0], sizes = [16, 32], strides = [1, 1]} : vector<16x96xbf16> to vector<16x32xbf16>
    %45 = vector.extract_strided_slice %43 {offsets = [0, 32], sizes = [16, 32], strides = [1, 1]} : vector<16x96xbf16> to vector<16x32xbf16>
    %46 = vector.extract_strided_slice %43 {offsets = [0, 64], sizes = [16, 32], strides = [1, 1]} : vector<16x96xbf16> to vector<16x32xbf16>
    %47 = vector.extract_strided_slice %44 {offsets = [0, 0], sizes = [8, 8], strides = [1, 1]} : vector<16x32xbf16> to vector<8x8xbf16>
    %48 = vector.extract_strided_slice %44 {offsets = [0, 8], sizes = [8, 8], strides = [1, 1]} : vector<16x32xbf16> to vector<8x8xbf16>
    %49 = vector.extract_strided_slice %44 {offsets = [0, 16], sizes = [8, 8], strides = [1, 1]} : vector<16x32xbf16> to vector<8x8xbf16>
    %50 = vector.extract_strided_slice %44 {offsets = [0, 24], sizes = [8, 8], strides = [1, 1]} : vector<16x32xbf16> to vector<8x8xbf16>
    %51 = vector.extract_strided_slice %44 {offsets = [8, 0], sizes = [8, 8], strides = [1, 1]} : vector<16x32xbf16> to vector<8x8xbf16>
    %52 = vector.extract_strided_slice %44 {offsets = [8, 8], sizes = [8, 8], strides = [1, 1]} : vector<16x32xbf16> to vector<8x8xbf16>
    %53 = vector.extract_strided_slice %44 {offsets = [8, 16], sizes = [8, 8], strides = [1, 1]} : vector<16x32xbf16> to vector<8x8xbf16>
    %54 = vector.extract_strided_slice %44 {offsets = [8, 24], sizes = [8, 8], strides = [1, 1]} : vector<16x32xbf16> to vector<8x8xbf16>
    %55 = vector.shape_cast %47 : vector<8x8xbf16> to vector<1x8x8xbf16>
    %56 = vector.shape_cast %48 : vector<8x8xbf16> to vector<1x8x8xbf16>
    %57 = vector.shape_cast %49 : vector<8x8xbf16> to vector<1x8x8xbf16>
    %58 = vector.shape_cast %50 : vector<8x8xbf16> to vector<1x8x8xbf16>
    %59 = vector.shape_cast %51 : vector<8x8xbf16> to vector<1x8x8xbf16>
    %60 = vector.shape_cast %52 : vector<8x8xbf16> to vector<1x8x8xbf16>
    %61 = vector.shape_cast %53 : vector<8x8xbf16> to vector<1x8x8xbf16>
    %62 = vector.shape_cast %54 : vector<8x8xbf16> to vector<1x8x8xbf16>
    %63 = tpu.concatenate %55, %56, %57, %58, %59, %60, %61, %62 in 0 : vector<1x8x8xbf16>, vector<1x8x8xbf16>, vector<1x8x8xbf16>, vector<1x8x8xbf16>, vector<1x8x8xbf16>, vector<1x8x8xbf16>, vector<1x8x8xbf16>, vector<1x8x8xbf16> -> vector<8x8x8xbf16>
    %64 = vector.extract_strided_slice %45 {offsets = [0, 0], sizes = [8, 8], strides = [1, 1]} : vector<16x32xbf16> to vector<8x8xbf16>
    %65 = vector.extract_strided_slice %45 {offsets = [0, 8], sizes = [8, 8], strides = [1, 1]} : vector<16x32xbf16> to vector<8x8xbf16>
    %66 = vector.extract_strided_slice %45 {offsets = [0, 16], sizes = [8, 8], strides = [1, 1]} : vector<16x32xbf16> to vector<8x8xbf16>
    %67 = vector.extract_strided_slice %45 {offsets = [0, 24], sizes = [8, 8], strides = [1, 1]} : vector<16x32xbf16> to vector<8x8xbf16>
    %68 = vector.extract_strided_slice %45 {offsets = [8, 0], sizes = [8, 8], strides = [1, 1]} : vector<16x32xbf16> to vector<8x8xbf16>
    %69 = vector.extract_strided_slice %45 {offsets = [8, 8], sizes = [8, 8], strides = [1, 1]} : vector<16x32xbf16> to vector<8x8xbf16>
    %70 = vector.extract_strided_slice %45 {offsets = [8, 16], sizes = [8, 8], strides = [1, 1]} : vector<16x32xbf16> to vector<8x8xbf16>
    %71 = vector.extract_strided_slice %45 {offsets = [8, 24], sizes = [8, 8], strides = [1, 1]} : vector<16x32xbf16> to vector<8x8xbf16>
    %72 = vector.shape_cast %64 : vector<8x8xbf16> to vector<1x8x8xbf16>
    %73 = vector.shape_cast %65 : vector<8x8xbf16> to vector<1x8x8xbf16>
    %74 = vector.shape_cast %66 : vector<8x8xbf16> to vector<1x8x8xbf16>
    %75 = vector.shape_cast %67 : vector<8x8xbf16> to vector<1x8x8xbf16>
    %76 = vector.shape_cast %68 : vector<8x8xbf16> to vector<1x8x8xbf16>
    %77 = vector.shape_cast %69 : vector<8x8xbf16> to vector<1x8x8xbf16>
    %78 = vector.shape_cast %70 : vector<8x8xbf16> to vector<1x8x8xbf16>
    %79 = vector.shape_cast %71 : vector<8x8xbf16> to vector<1x8x8xbf16>
    %80 = tpu.concatenate %72, %73, %74, %75, %76, %77, %78, %79 in 0 : vector<1x8x8xbf16>, vector<1x8x8xbf16>, vector<1x8x8xbf16>, vector<1x8x8xbf16>, vector<1x8x8xbf16>, vector<1x8x8xbf16>, vector<1x8x8xbf16>, vector<1x8x8xbf16> -> vector<8x8x8xbf16>
    %81 = vector.extract_strided_slice %46 {offsets = [0, 0], sizes = [8, 8], strides = [1, 1]} : vector<16x32xbf16> to vector<8x8xbf16>
    %82 = vector.extract_strided_slice %46 {offsets = [0, 8], sizes = [8, 8], strides = [1, 1]} : vector<16x32xbf16> to vector<8x8xbf16>
    %83 = vector.extract_strided_slice %46 {offsets = [0, 16], sizes = [8, 8], strides = [1, 1]} : vector<16x32xbf16> to vector<8x8xbf16>
    %84 = vector.extract_strided_slice %46 {offsets = [0, 24], sizes = [8, 8], strides = [1, 1]} : vector<16x32xbf16> to vector<8x8xbf16>
    %85 = vector.extract_strided_slice %46 {offsets = [8, 0], sizes = [8, 8], strides = [1, 1]} : vector<16x32xbf16> to vector<8x8xbf16>
    %86 = vector.extract_strided_slice %46 {offsets = [8, 8], sizes = [8, 8], strides = [1, 1]} : vector<16x32xbf16> to vector<8x8xbf16>
    %87 = vector.extract_strided_slice %46 {offsets = [8, 16], sizes = [8, 8], strides = [1, 1]} : vector<16x32xbf16> to vector<8x8xbf16>
    %88 = vector.extract_strided_slice %46 {offsets = [8, 24], sizes = [8, 8], strides = [1, 1]} : vector<16x32xbf16> to vector<8x8xbf16>
    %89 = vector.shape_cast %81 : vector<8x8xbf16> to vector<1x8x8xbf16>
    %90 = vector.shape_cast %82 : vector<8x8xbf16> to vector<1x8x8xbf16>
    %91 = vector.shape_cast %83 : vector<8x8xbf16> to vector<1x8x8xbf16>
    %92 = vector.shape_cast %84 : vector<8x8xbf16> to vector<1x8x8xbf16>
    %93 = vector.shape_cast %85 : vector<8x8xbf16> to vector<1x8x8xbf16>
    %94 = vector.shape_cast %86 : vector<8x8xbf16> to vector<1x8x8xbf16>
    %95 = vector.shape_cast %87 : vector<8x8xbf16> to vector<1x8x8xbf16>
    %96 = vector.shape_cast %88 : vector<8x8xbf16> to vector<1x8x8xbf16>
    %97 = tpu.concatenate %89, %90, %91, %92, %93, %94, %95, %96 in 0 : vector<1x8x8xbf16>, vector<1x8x8xbf16>, vector<1x8x8xbf16>, vector<1x8x8xbf16>, vector<1x8x8xbf16>, vector<1x8x8xbf16>, vector<1x8x8xbf16>, vector<1x8x8xbf16> -> vector<8x8x8xbf16>
    "tpu.trace_start"() <{level = 10 : i32, message = "nqd,nkd->nqk"}> : () -> ()
    %cst_20 = arith.constant dense<0.000000e+00> : vector<8x8x8xf32>
    %98 = tpu.matmul %63, %80, %cst_20 {dimension_numbers = #tpu.dot_dimension_numbers<[2], [2], [1], [1], [0, 0, 0, 1, 1, 1], [0], [0]>} : vector<8x8x8xbf16>, vector<8x8x8xbf16>, vector<8x8x8xf32> -> vector<8x8x8xf32>
    "tpu.trace_stop"() : () -> ()
    %cst_21 = arith.constant dense<0xFF800000> : vector<8x8xf32>
    %99 = vector.multi_reduction <maximumf>, %98, %cst_21 [2] : vector<8x8x8xf32> to vector<8x8xf32>
    %100 = vector.shape_cast %99 : vector<8x8xf32> to vector<8x8x1xf32>
    %101 = vector.broadcast %100 : vector<8x8x1xf32> to vector<8x8x8xf32>
    %102 = arith.subf %98, %101 : vector<8x8x8xf32>
    %103 = math.exp %102 : vector<8x8x8xf32>
    %cst_22 = arith.constant dense<0.000000e+00> : vector<8x8xf32>
    %104 = vector.multi_reduction <add>, %103, %cst_22 [2] : vector<8x8x8xf32> to vector<8x8xf32>
    %105 = vector.shape_cast %104 : vector<8x8xf32> to vector<8x8x1xf32>
    %106 = tpu.reciprocal %105 {approx = true} : vector<8x8x1xf32> -> vector<8x8x1xf32>
    %107 = vector.broadcast %106 : vector<8x8x1xf32> to vector<8x8x8xf32>
    %108 = arith.mulf %103, %107 : vector<8x8x8xf32>
    %109 = arith.truncf %108 : vector<8x8x8xf32> to vector<8x8x8xbf16>
    "tpu.trace_start"() <{level = 10 : i32, message = "nqk,nkd->nqd"}> : () -> ()
    %cst_23 = arith.constant dense<0.000000e+00> : vector<8x8x8xf32>
    %110 = tpu.matmul %109, %97, %cst_23 {dimension_numbers = #tpu.dot_dimension_numbers<[2], [1], [1], [2], [0, 0, 0, 1, 1, 2], [0], [0]>} : vector<8x8x8xbf16>, vector<8x8x8xbf16>, vector<8x8x8xf32> -> vector<8x8x8xf32>
    "tpu.trace_stop"() : () -> ()
    %111 = vector.extract_strided_slice %110 {offsets = [0, 0, 0], sizes = [1, 8, 8], strides = [1, 1, 1]} : vector<8x8x8xf32> to vector<1x8x8xf32>
    %112 = vector.shape_cast %111 : vector<1x8x8xf32> to vector<8x8xf32>
    %113 = vector.extract_strided_slice %110 {offsets = [1, 0, 0], sizes = [1, 8, 8], strides = [1, 1, 1]} : vector<8x8x8xf32> to vector<1x8x8xf32>
    %114 = vector.shape_cast %113 : vector<1x8x8xf32> to vector<8x8xf32>
    %115 = vector.extract_strided_slice %110 {offsets = [2, 0, 0], sizes = [1, 8, 8], strides = [1, 1, 1]} : vector<8x8x8xf32> to vector<1x8x8xf32>
    %116 = vector.shape_cast %115 : vector<1x8x8xf32> to vector<8x8xf32>
    %117 = vector.extract_strided_slice %110 {offsets = [3, 0, 0], sizes = [1, 8, 8], strides = [1, 1, 1]} : vector<8x8x8xf32> to vector<1x8x8xf32>
    %118 = vector.shape_cast %117 : vector<1x8x8xf32> to vector<8x8xf32>
    %119 = tpu.concatenate %112, %114, %116, %118 in 1 : vector<8x8xf32>, vector<8x8xf32>, vector<8x8xf32>, vector<8x8xf32> -> vector<8x32xf32>
    %120 = vector.extract_strided_slice %110 {offsets = [4, 0, 0], sizes = [1, 8, 8], strides = [1, 1, 1]} : vector<8x8x8xf32> to vector<1x8x8xf32>
    %121 = vector.shape_cast %120 : vector<1x8x8xf32> to vector<8x8xf32>
    %122 = vector.extract_strided_slice %110 {offsets = [5, 0, 0], sizes = [1, 8, 8], strides = [1, 1, 1]} : vector<8x8x8xf32> to vector<1x8x8xf32>
    %123 = vector.shape_cast %122 : vector<1x8x8xf32> to vector<8x8xf32>
    %124 = vector.extract_strided_slice %110 {offsets = [6, 0, 0], sizes = [1, 8, 8], strides = [1, 1, 1]} : vector<8x8x8xf32> to vector<1x8x8xf32>
    %125 = vector.shape_cast %124 : vector<1x8x8xf32> to vector<8x8xf32>
    %126 = vector.extract_strided_slice %110 {offsets = [7, 0, 0], sizes = [1, 8, 8], strides = [1, 1, 1]} : vector<8x8x8xf32> to vector<1x8x8xf32>
    %127 = vector.shape_cast %126 : vector<1x8x8xf32> to vector<8x8xf32>
    %128 = tpu.concatenate %121, %123, %125, %127 in 1 : vector<8x8xf32>, vector<8x8xf32>, vector<8x8xf32>, vector<8x8xf32> -> vector<8x32xf32>
    %129 = tpu.concatenate %119, %128 in 0 : vector<8x32xf32>, vector<8x32xf32> -> vector<16x32xf32>
    %130 = arith.truncf %129 : vector<16x32xf32> to vector<16x32xbf16>
    %c0_24 = arith.constant 0 : index
    %c0_25 = arith.constant 0 : index
    %c0_26 = arith.constant 0 : index
    %131 = vector.load %arg7[%c0_24, %c0_25, %c0_26] : memref<1x32x32xbf16, #tpu.memory_space<vmem>>, vector<1x32x32xbf16>
    %132 = vector.shape_cast %131 : vector<1x32x32xbf16> to vector<32x32xbf16>
    %cst_27 = arith.constant dense<0.000000e+00> : vector<16x32xf32>
    %133 = tpu.matmul %130, %132, %cst_27 {dimension_numbers = #tpu.dot_dimension_numbers<[1], [0], [0], [1], [0, 0, 1, 1], [], []>} : vector<16x32xbf16>, vector<32x32xbf16>, vector<16x32xf32> -> vector<16x32xf32>
    %c0_28 = arith.constant 0 : index
    %c0_29 = arith.constant 0 : index
    %c0_30 = arith.constant 0 : index
    %134 = vector.load %arg8[%c0_28, %c0_29, %c0_30] : memref<1x1x32xf32, #tpu.memory_space<vmem>>, vector<1x1x32xf32>
    %135 = vector.shape_cast %134 : vector<1x1x32xf32> to vector<1x32xf32>
    %136 = vector.broadcast %135 : vector<1x32xf32> to vector<16x32xf32>
    %137 = arith.addf %133, %136 : vector<16x32xf32>
    %c0_31 = arith.constant 0 : index
    %c0_32 = arith.constant 0 : index
    %c0_33 = arith.constant 0 : index
    %138 = vector.load %arg9[%c0_31, %c0_32, %c0_33] : memref<1x1x32xf32, #tpu.memory_space<vmem>>, vector<1x1x32xf32>
    %139 = vector.shape_cast %138 : vector<1x1x32xf32> to vector<1x32xf32>
    %140 = vector.broadcast %139 : vector<1x32xf32> to vector<16x32xf32>
    %141 = arith.mulf %140, %137 : vector<16x32xf32>
    %142 = arith.addf %8, %141 : vector<16x32xf32>
    %c0_34 = arith.constant 0 : index
    %c0_35 = arith.constant 0 : index
    %c0_36 = arith.constant 0 : index
    %143 = vector.load %arg10[%c0_34, %c0_35, %c0_36] : memref<1x1x32xf32, #tpu.memory_space<vmem>>, vector<1x1x32xf32>
    %144 = vector.shape_cast %143 : vector<1x1x32xf32> to vector<1x32xf32>
    %c0_37 = arith.constant 0 : index
    %c0_38 = arith.constant 0 : index
    %c0_39 = arith.constant 0 : index
    %145 = vector.load %arg11[%c0_37, %c0_38, %c0_39] : memref<1x1x32xf32, #tpu.memory_space<vmem>>, vector<1x1x32xf32>
    %146 = vector.shape_cast %145 : vector<1x1x32xf32> to vector<1x32xf32>
    %cst_40 = arith.constant dense<0.000000e+00> : vector<16xf32>
    %147 = vector.multi_reduction <add>, %142, %cst_40 [1] : vector<16x32xf32> to vector<16xf32>
    %148 = vector.shape_cast %147 : vector<16xf32> to vector<16x1xf32>
    %cst_41 = arith.constant 3.200000e+01 : f32
    %149 = vector.broadcast %cst_41 : f32 to vector<16x1xf32>
    %150 = arith.divf %148, %149 : vector<16x1xf32>
    %151 = vector.broadcast %150 : vector<16x1xf32> to vector<16x32xf32>
    %152 = arith.subf %142, %151 : vector<16x32xf32>
    %153 = arith.mulf %152, %152 : vector<16x32xf32>
    %cst_42 = arith.constant dense<0.000000e+00> : vector<16xf32>
    %154 = vector.multi_reduction <add>, %153, %cst_42 [1] : vector<16x32xf32> to vector<16xf32>
    %155 = vector.shape_cast %154 : vector<16xf32> to vector<16x1xf32>
    %cst_43 = arith.constant 3.200000e+01 : f32
    %156 = vector.broadcast %cst_43 : f32 to vector<16x1xf32>
    %157 = arith.divf %155, %156 : vector<16x1xf32>
    %158 = vector.broadcast %150 : vector<16x1xf32> to vector<16x32xf32>
    %159 = arith.subf %142, %158 : vector<16x32xf32>
    %cst_44 = arith.constant 9.99999996E-13 : f32
    %160 = vector.broadcast %cst_44 : f32 to vector<16x1xf32>
    %161 = arith.addf %157, %160 : vector<16x1xf32>
    %162 = math.rsqrt %161 : vector<16x1xf32>
    %163 = vector.broadcast %162 : vector<16x1xf32> to vector<16x32xf32>
    %164 = arith.mulf %159, %163 : vector<16x32xf32>
    %165 = vector.broadcast %144 : vector<1x32xf32> to vector<16x32xf32>
    %166 = arith.mulf %164, %165 : vector<16x32xf32>
    %167 = vector.broadcast %146 : vector<1x32xf32> to vector<16x32xf32>
    %168 = arith.addf %166, %167 : vector<16x32xf32>
    %169 = arith.truncf %168 : vector<16x32xf32> to vector<16x32xbf16>
    %c0_45 = arith.constant 0 : index
    %c0_46 = arith.constant 0 : index
    %c0_47 = arith.constant 0 : index
    %170 = vector.load %arg12[%c0_45, %c0_46, %c0_47] : memref<1x32x128xbf16, #tpu.memory_space<vmem>>, vector<1x32x128xbf16>
    %171 = vector.shape_cast %170 : vector<1x32x128xbf16> to vector<32x128xbf16>
    %cst_48 = arith.constant dense<0.000000e+00> : vector<16x128xf32>
    %172 = tpu.matmul %169, %171, %cst_48 {dimension_numbers = #tpu.dot_dimension_numbers<[1], [0], [0], [1], [0, 0, 1, 1], [], []>} : vector<16x32xbf16>, vector<32x128xbf16>, vector<16x128xf32> -> vector<16x128xf32>
    %c0_49 = arith.constant 0 : index
    %c0_50 = arith.constant 0 : index
    %c0_51 = arith.constant 0 : index
    %173 = vector.load %arg13[%c0_49, %c0_50, %c0_51] : memref<1x1x128xf32, #tpu.memory_space<vmem>>, vector<1x1x128xf32>
    %174 = vector.shape_cast %173 : vector<1x1x128xf32> to vector<1x128xf32>
    %175 = vector.broadcast %174 : vector<1x128xf32> to vector<16x128xf32>
    %176 = arith.addf %172, %175 : vector<16x128xf32>
    %177 = arith.mulf %176, %176 : vector<16x128xf32>
    %178 = arith.mulf %176, %177 : vector<16x128xf32>
    %cst_52 = arith.constant 4.471500e-02 : f32
    %179 = vector.broadcast %cst_52 : f32 to vector<16x128xf32>
    %180 = arith.mulf %179, %178 : vector<16x128xf32>
    %181 = arith.addf %176, %180 : vector<16x128xf32>
    %cst_53 = arith.constant 0.797884583 : f32
    %182 = vector.broadcast %cst_53 : f32 to vector<16x128xf32>
    %183 = arith.mulf %182, %181 : vector<16x128xf32>
    %184 = math.tanh %183 : vector<16x128xf32>
    %cst_54 = arith.constant 1.000000e+00 : f32
    %185 = vector.broadcast %cst_54 : f32 to vector<16x128xf32>
    %186 = arith.addf %185, %184 : vector<16x128xf32>
    %cst_55 = arith.constant 5.000000e-01 : f32
    %187 = vector.broadcast %cst_55 : f32 to vector<16x128xf32>
    %188 = arith.mulf %187, %186 : vector<16x128xf32>
    %189 = arith.mulf %176, %188 : vector<16x128xf32>
    %190 = arith.truncf %189 : vector<16x128xf32> to vector<16x128xbf16>
    %c0_56 = arith.constant 0 : index
    %c0_57 = arith.constant 0 : index
    %c0_58 = arith.constant 0 : index
    %191 = vector.load %arg14[%c0_56, %c0_57, %c0_58] : memref<1x128x32xbf16, #tpu.memory_space<vmem>>, vector<1x128x32xbf16>
    %192 = vector.shape_cast %191 : vector<1x128x32xbf16> to vector<128x32xbf16>
    %cst_59 = arith.constant dense<0.000000e+00> : vector<16x32xf32>
    %193 = tpu.matmul %190, %192, %cst_59 {dimension_numbers = #tpu.dot_dimension_numbers<[1], [0], [0], [1], [0, 0, 1, 1], [], []>} : vector<16x128xbf16>, vector<128x32xbf16>, vector<16x32xf32> -> vector<16x32xf32>
    %c0_60 = arith.constant 0 : index
    %c0_61 = arith.constant 0 : index
    %c0_62 = arith.constant 0 : index
    %194 = vector.load %arg15[%c0_60, %c0_61, %c0_62] : memref<1x1x32xf32, #tpu.memory_space<vmem>>, vector<1x1x32xf32>
    %195 = vector.shape_cast %194 : vector<1x1x32xf32> to vector<1x32xf32>
    %196 = vector.broadcast %195 : vector<1x32xf32> to vector<16x32xf32>
    %197 = arith.addf %193, %196 : vector<16x32xf32>
    %c0_63 = arith.constant 0 : index
    %c0_64 = arith.constant 0 : index
    %c0_65 = arith.constant 0 : index
    %198 = vector.load %arg16[%c0_63, %c0_64, %c0_65] : memref<1x1x32xf32, #tpu.memory_space<vmem>>, vector<1x1x32xf32>
    %199 = vector.shape_cast %198 : vector<1x1x32xf32> to vector<1x32xf32>
    %200 = vector.broadcast %199 : vector<1x32xf32> to vector<16x32xf32>
    %201 = arith.mulf %200, %197 : vector<16x32xf32>
    %202 = arith.addf %142, %201 : vector<16x32xf32>
    %203 = vector.extract_strided_slice %202 {offsets = [0, 0], sizes = [8, 32], strides = [1, 1]} : vector<16x32xf32> to vector<8x32xf32>
    %204 = vector.extract_strided_slice %202 {offsets = [8, 0], sizes = [8, 32], strides = [1, 1]} : vector<16x32xf32> to vector<8x32xf32>
    %205 = vector.shape_cast %203 : vector<8x32xf32> to vector<1x8x32xf32>
    %206 = vector.shape_cast %204 : vector<8x32xf32> to vector<1x8x32xf32>
    %207 = tpu.concatenate %205, %206 in 0 : vector<1x8x32xf32>, vector<1x8x32xf32> -> vector<2x8x32xf32>
    %c0_66 = arith.constant 0 : index
    %c0_67 = arith.constant 0 : index
    %c0_68 = arith.constant 0 : index
    %208 = vector.load %arg17[%c0_66, %c0_67, %c0_68] : memref<2x8x32xf32, #tpu.memory_space<vmem>>, vector<2x8x32xf32>
    tpu.vector_store %arg17[%c0_66, %c0_67, %c0_68], %207 {strides = array<i32>} : memref<2x8x32xf32, #tpu.memory_space<vmem>>, vector<2x8x32xf32>,
    return
  }
  func.func @transform_0(%arg0: i32, %arg1: i32) -> (i32, i32, i32) {
    %c0_i32 = arith.constant 0 : i32
    %c0_i32_0 = arith.constant 0 : i32
    %c0_i32_1 = arith.constant 0 : i32
    return %arg0, %c0_i32, %c0_i32_0 : i32, i32, i32
  }
  func.func @transform_1(%arg0: i32, %arg1: i32) -> (i32, i32, i32) {
    %c0_i32 = arith.constant 0 : i32
    %c0_i32_0 = arith.constant 0 : i32
    %c0_i32_1 = arith.constant 0 : i32
    return %arg1, %c0_i32, %c0_i32_0 : i32, i32, i32
  }
  func.func @transform_2(%arg0: i32, %arg1: i32) -> (i32, i32, i32) {
    %c0_i32 = arith.constant 0 : i32
    %c0_i32_0 = arith.constant 0 : i32
    %c0_i32_1 = arith.constant 0 : i32
    return %arg1, %c0_i32, %c0_i32_0 : i32, i32, i32
  }
  func.func @transform_3(%arg0: i32, %arg1: i32) -> (i32, i32, i32) {
    %c0_i32 = arith.constant 0 : i32
    %c0_i32_0 = arith.constant 0 : i32
    %c0_i32_1 = arith.constant 0 : i32
    return %arg1, %c0_i32, %c0_i32_0 : i32, i32, i32
  }
  func.func @transform_4(%arg0: i32, %arg1: i32) -> (i32, i32, i32) {
    %c0_i32 = arith.constant 0 : i32
    %c0_i32_0 = arith.constant 0 : i32
    %c0_i32_1 = arith.constant 0 : i32
    return %arg1, %c0_i32, %c0_i32_0 : i32, i32, i32
  }
  func.func @transform_5(%arg0: i32, %arg1: i32) -> (i32, i32, i32) {
    %c0_i32 = arith.constant 0 : i32
    %c0_i32_0 = arith.constant 0 : i32
    %c0_i32_1 = arith.constant 0 : i32
    return %arg1, %c0_i32, %c0_i32_0 : i32, i32, i32
  }
  func.func @transform_6(%arg0: i32, %arg1: i32) -> (i32, i32, i32) {
    %c0_i32 = arith.constant 0 : i32
    %c0_i32_0 = arith.constant 0 : i32
    %c0_i32_1 = arith.constant 0 : i32
    return %arg1, %c0_i32, %c0_i32_0 : i32, i32, i32
  }
  func.func @transform_7(%arg0: i32, %arg1: i32) -> (i32, i32, i32) {
    %c0_i32 = arith.constant 0 : i32
    %c0_i32_0 = arith.constant 0 : i32
    %c0_i32_1 = arith.constant 0 : i32
    return %arg1, %c0_i32, %c0_i32_0 : i32, i32, i32
  }
  func.func @transform_8(%arg0: i32, %arg1: i32) -> (i32, i32, i32) {
    %c0_i32 = arith.constant 0 : i32
    %c0_i32_0 = arith.constant 0 : i32
    %c0_i32_1 = arith.constant 0 : i32
    return %arg1, %c0_i32, %c0_i32_0 : i32, i32, i32
  }
  func.func @transform_9(%arg0: i32, %arg1: i32) -> (i32, i32, i32) {
    %c0_i32 = arith.constant 0 : i32
    %c0_i32_0 = arith.constant 0 : i32
    %c0_i32_1 = arith.constant 0 : i32
    return %arg1, %c0_i32, %c0_i32_0 : i32, i32, i32
  }
  func.func @transform_10(%arg0: i32, %arg1: i32) -> (i32, i32, i32) {
    %c0_i32 = arith.constant 0 : i32
    %c0_i32_0 = arith.constant 0 : i32
    %c0_i32_1 = arith.constant 0 : i32
    return %arg1, %c0_i32, %c0_i32_0 : i32, i32, i32
  }
  func.func @transform_11(%arg0: i32, %arg1: i32) -> (i32, i32, i32) {
    %c0_i32 = arith.constant 0 : i32
    %c0_i32_0 = arith.constant 0 : i32
    %c0_i32_1 = arith.constant 0 : i32
    return %arg1, %c0_i32, %c0_i32_0 : i32, i32, i32
  }
  func.func @transform_12(%arg0: i32, %arg1: i32) -> (i32, i32, i32) {
    %c0_i32 = arith.constant 0 : i32
    %c0_i32_0 = arith.constant 0 : i32
    %c0_i32_1 = arith.constant 0 : i32
    return %arg1, %c0_i32, %c0_i32_0 : i32, i32, i32
  }
  func.func @transform_13(%arg0: i32, %arg1: i32) -> (i32, i32, i32) {
    %c0_i32 = arith.constant 0 : i32
    %c0_i32_0 = arith.constant 0 : i32
    %c0_i32_1 = arith.constant 0 : i32
    return %arg1, %c0_i32, %c0_i32_0 : i32, i32, i32
  }
  func.func @transform_14(%arg0: i32, %arg1: i32) -> (i32, i32, i32) {
    %c0_i32 = arith.constant 0 : i32
    %c0_i32_0 = arith.constant 0 : i32
    %c0_i32_1 = arith.constant 0 : i32
    return %arg1, %c0_i32, %c0_i32_0 : i32, i32, i32
  }
  func.func @transform_15(%arg0: i32, %arg1: i32) -> (i32, i32, i32) {
    %c0_i32 = arith.constant 0 : i32
    %c0_i32_0 = arith.constant 0 : i32
    %c0_i32_1 = arith.constant 0 : i32
    return %arg0, %c0_i32, %c0_i32_0 : i32, i32, i32
  }
}

</mosaic_0001>

<llo_original>
// kernel: tpu_custom_call.1
$region0: #{tpu_custom_call.1}
  #allocation0 [shape = 'u32[]', space=smem, size = 0x4, offset = 0x4, fixed_abs, tag = 'smem constant byte address 0x4 - core index']
  #allocation1 [shape = 'u32[144,128]{1,0:T(1,128)}', space=vmem, size = 0x12000, scoped, tag = 'internal scratch']
  %s0 = inlined_call_operand.vmem [shape: f32[2,8,32], index: 0, kind: input, shape index: {}]
  %s1 = inlined_call_operand.vmem [shape: f32[2,1,32], index: 1, kind: input, shape index: {}]
  %s2 = inlined_call_operand.vmem [shape: f32[2,1,32], index: 2, kind: input, shape index: {}]
  %s3 = inlined_call_operand.vmem [shape: bf16[2,32,96], index: 3, kind: input, shape index: {}]
  %s4 = inlined_call_operand.vmem [shape: f32[2,1,96], index: 4, kind: input, shape index: {}]
  %s5 = inlined_call_operand.vmem [shape: bf16[2,32,32], index: 5, kind: input, shape index: {}]
  %s6 = inlined_call_operand.vmem [shape: f32[2,1,32], index: 6, kind: input, shape index: {}]
  %s7 = inlined_call_operand.vmem [shape: f32[2,1,32], index: 7, kind: input, shape index: {}]
  %s8 = inlined_call_operand.vmem [shape: f32[2,1,32], index: 8, kind: input, shape index: {}]
  %s9 = inlined_call_operand.vmem [shape: f32[2,1,32], index: 9, kind: input, shape index: {}]
  %s10 = inlined_call_operand.vmem [shape: bf16[2,32,128], index: 10, kind: input, shape index: {}]
  %s11 = inlined_call_operand.vmem [shape: f32[2,1,128], index: 11, kind: input, shape index: {}]
  %s12 = inlined_call_operand.vmem [shape: bf16[2,128,32], index: 12, kind: input, shape index: {}]
  %s13 = inlined_call_operand.vmem [shape: f32[2,1,32], index: 13, kind: input, shape index: {}]
  %s14 = inlined_call_operand.vmem [shape: f32[2,1,32], index: 14, kind: input, shape index: {}]
  %s15 = inlined_call_operand.hbm [shape: f32[2,8,32], index: 15, kind: output, shape index: {}]
  %s16 = sld [smem:[#allocation0]]
  $region97: #{tpu_custom_call.1} parent=0
    _
  %s18 = ssub.s32 1, %s16
  %s19 = scalar_select 0, %s18, %s16
  $region1: #{tpu_custom_call.1} parent=0
    #allocation2 [shape = 'u8[8192]{0}', space=vmem, size = 0x2000, scoped, tag = 'output window, operand 0, single buffered']
    #allocation3 [shape = 's32[2]{0}', space=sflag, size = 0x8, scoped, tag = 'scoped memory for tpu_custom_call.1']
    %20 = vsyncpa [#allocation3], 0
    loop: start=0, step=1, limit=4
    $region2: #{tpu_custom_call.1} parent=1 // loop_pre_header
      _
    $region3: #{tpu_custom_call.1} parent=1 // loop_header
      %s22 = sphi 0, %s26
      %p23 = scmp.ge.s32.totalorder %s22, 4
      %s29 = sphi 0, %s41
      %s30 = sphi 0, %s37
      %s31 = sphi 0, %s29
      %s32 = sphi 0, %s30
      %s33 = sphi 0, %s31
      %s34 = sphi 0, %s32
      %s44 = sphi 0, %s46
      %s47 = sphi 0, %s44
      %s48 = sphi 0, %s47
      %s64 = sphi 0, %s48
      %s70 = sphi 0, %s72
      %s73 = sphi 0, %s70
      %s74 = sphi 0, %s73
      %s90 = sphi 0, %s74
      %s96 = sphi 0, %s98
      %s99 = sphi 0, %s96
      %s100 = sphi 0, %s99
      %s116 = sphi 0, %s100
      %s122 = sphi 0, %s124
      %s125 = sphi 0, %s122
      %s126 = sphi 0, %s125
      %s142 = sphi 0, %s126
      %s148 = sphi 0, %s150
      %s151 = sphi 0, %s148
      %s152 = sphi 0, %s151
      %s168 = sphi 0, %s152
      %s174 = sphi 0, %s176
      %s177 = sphi 0, %s174
      %s178 = sphi 0, %s177
      %s194 = sphi 0, %s178
      %s200 = sphi 0, %s202
      %s203 = sphi 0, %s200
      %s204 = sphi 0, %s203
      %s220 = sphi 0, %s204
      %s226 = sphi 0, %s228
      %s229 = sphi 0, %s226
      %s230 = sphi 0, %s229
      %s246 = sphi 0, %s230
      %s252 = sphi 0, %s254
      %s255 = sphi 0, %s252
      %s256 = sphi 0, %s255
      %s272 = sphi 0, %s256
      %s278 = sphi 0, %s280
      %s281 = sphi 0, %s278
      %s282 = sphi 0, %s281
      %s298 = sphi 0, %s282
      %s304 = sphi 0, %s306
      %s307 = sphi 0, %s304
      %s308 = sphi 0, %s307
      %s324 = sphi 0, %s308
      %s330 = sphi 0, %s332
      %s333 = sphi 0, %s330
      %s334 = sphi 0, %s333
      %s350 = sphi 0, %s334
      %s356 = sphi 0, %s358
      %s359 = sphi 0, %s356
      %s360 = sphi 0, %s359
      %s376 = sphi 0, %s360
      %s382 = sphi 0, %s384
      %s385 = sphi 0, %s382
      %s386 = sphi 0, %s385
      %s402 = sphi 0, %s386
      %s408 = sphi 0, %s410
      %s411 = sphi 0, %s408
      %s412 = sphi 0, %s411
      %s428 = sphi 0, %s412
      %s434 = sphi 0, %s436
      %s437 = sphi 0, %s434
      %s438 = sphi 0, %s437
      %s454 = sphi 0, %s438
    $region4: #{tpu_custom_call.1} parent=1 // loop_header_branch
      %25 = sbr.rel (%p23) target = $region8
    $region5: #{tpu_custom_call.1} parent=1 // loop_body
      %s27 = ssub.s32 %s22, 1
      %s28 = ssub.s32 %s22, 2
      %s35 = sadd.s32 1, %s30
      %p36 = scmp.ge.s32.totalorder %s35, 2
      %s37 = scalar_select %p36, 0, %s35
      %s38 = sadd.s32 1, %s29
      %s39 = scalar_select %p36, %s38, %s29
      %p40 = scmp.ge.s32.totalorder %s39, 1
      %s41 = scalar_select %p40, 0, %s39
      %s42 = ssub.s32 %s29, %s41
      %p43 = scmp.eq.s32.totalorder %s42, 0
      %s45 = sadd.s32 %s44, 1
      %s46 = scalar_select %p43, %s44, %s45
      %p49 = pneg %p43
      %p50 = scmp.eq.s32.totalorder %s22, 1
      %p51 = por %p49, %p50
      %p52 = scmp.ne.s32.totalorder %s44, %s47
      %p53 = scmp.eq.s32.totalorder %s22, 0
      %p54 = por %p52, %p53
      %p55 = scmp.ne.s32.totalorder %s44, %s47
      %p56 = scmp.eq.s32.totalorder %s27, 1
      %p57 = por %p55, %p56
      %p58 = scmp.ne.s32.totalorder %s47, %s48
      %p59 = scmp.eq.s32.totalorder %s27, 0
      %p60 = por %p58, %p59
      %p61 = scmp.ne.s32.totalorder %s47, %s48
      %p62 = scmp.eq.s32.totalorder %s28, 1
      %p63 = por %p61, %p62
      %p65 = scmp.ne.s32.totalorder %s48, %s64
      %p66 = scmp.eq.s32.totalorder %s28, 0
      %p67 = por %p65, %p66
      %s68 = ssub.s32 %s30, %s37
      %p69 = scmp.eq.s32.totalorder %s68, 0
      %s71 = sadd.s32 %s70, 1
      %s72 = scalar_select %p69, %s70, %s71
      %p75 = pneg %p69
      %p76 = scmp.eq.s32.totalorder %s22, 1
      %p77 = por %p75, %p76
      %p78 = scmp.ne.s32.totalorder %s70, %s73
      %p79 = scmp.eq.s32.totalorder %s22, 0
      %p80 = por %p78, %p79
      %p81 = scmp.ne.s32.totalorder %s70, %s73
      %p82 = scmp.eq.s32.totalorder %s27, 1
      %p83 = por %p81, %p82
      %p84 = scmp.ne.s32.totalorder %s73, %s74
      %p85 = scmp.eq.s32.totalorder %s27, 0
      %p86 = por %p84, %p85
      %p87 = scmp.ne.s32.totalorder %s73, %s74
      %p88 = scmp.eq.s32.totalorder %s28, 1
      %p89 = por %p87, %p88
      %p91 = scmp.ne.s32.totalorder %s74, %s90
      %p92 = scmp.eq.s32.totalorder %s28, 0
      %p93 = por %p91, %p92
      %s94 = ssub.s32 %s30, %s37
      %p95 = scmp.eq.s32.totalorder %s94, 0
      %s97 = sadd.s32 %s96, 1
      %s98 = scalar_select %p95, %s96, %s97
      %p101 = pneg %p95
      %p102 = scmp.eq.s32.totalorder %s22, 1
      %p103 = por %p101, %p102
      %p104 = scmp.ne.s32.totalorder %s96, %s99
      %p105 = scmp.eq.s32.totalorder %s22, 0
      %p106 = por %p104, %p105
      %p107 = scmp.ne.s32.totalorder %s96, %s99
      %p108 = scmp.eq.s32.totalorder %s27, 1
      %p109 = por %p107, %p108
      %p110 = scmp.ne.s32.totalorder %s99, %s100
      %p111 = scmp.eq.s32.totalorder %s27, 0
      %p112 = por %p110, %p111
      %p113 = scmp.ne.s32.totalorder %s99, %s100
      %p114 = scmp.eq.s32.totalorder %s28, 1
      %p115 = por %p113, %p114
      %p117 = scmp.ne.s32.totalorder %s100, %s116
      %p118 = scmp.eq.s32.totalorder %s28, 0
      %p119 = por %p117, %p118
      %s120 = ssub.s32 %s30, %s37
      %p121 = scmp.eq.s32.totalorder %s120, 0
      %s123 = sadd.s32 %s122, 1
      %s124 = scalar_select %p121, %s122, %s123
      %p127 = pneg %p121
      %p128 = scmp.eq.s32.totalorder %s22, 1
      %p129 = por %p127, %p128
      %p130 = scmp.ne.s32.totalorder %s122, %s125
      %p131 = scmp.eq.s32.totalorder %s22, 0
      %p132 = por %p130, %p131
      %p133 = scmp.ne.s32.totalorder %s122, %s125
      %p134 = scmp.eq.s32.totalorder %s27, 1
      %p135 = por %p133, %p134
      %p136 = scmp.ne.s32.totalorder %s125, %s126
      %p137 = scmp.eq.s32.totalorder %s27, 0
      %p138 = por %p136, %p137
      %p139 = scmp.ne.s32.totalorder %s125, %s126
      %p140 = scmp.eq.s32.totalorder %s28, 1
      %p141 = por %p139, %p140
      %p143 = scmp.ne.s32.totalorder %s126, %s142
      %p144 = scmp.eq.s32.totalorder %s28, 0
      %p145 = por %p143, %p144
      %s146 = ssub.s32 %s30, %s37
      %p147 = scmp.eq.s32.totalorder %s146, 0
      %s149 = sadd.s32 %s148, 1
      %s150 = scalar_select %p147, %s148, %s149
      %p153 = pneg %p147
      %p154 = scmp.eq.s32.totalorder %s22, 1
      %p155 = por %p153, %p154
      %p156 = scmp.ne.s32.totalorder %s148, %s151
      %p157 = scmp.eq.s32.totalorder %s22, 0
      %p158 = por %p156, %p157
      %p159 = scmp.ne.s32.totalorder %s148, %s151
      %p160 = scmp.eq.s32.totalorder %s27, 1
      %p161 = por %p159, %p160
      %p162 = scmp.ne.s32.totalorder %s151, %s152
      %p163 = scmp.eq.s32.totalorder %s27, 0
      %p164 = por %p162, %p163
      %p165 = scmp.ne.s32.totalorder %s151, %s152
      %p166 = scmp.eq.s32.totalorder %s28, 1
      %p167 = por %p165, %p166
      %p169 = scmp.ne.s32.totalorder %s152, %s168
      %p170 = scmp.eq.s32.totalorder %s28, 0
      %p171 = por %p169, %p170
      %s172 = ssub.s32 %s30, %s37
      %p173 = scmp.eq.s32.totalorder %s172, 0
      %s175 = sadd.s32 %s174, 1
      %s176 = scalar_select %p173, %s174, %s175
      %p179 = pneg %p173
      %p180 = scmp.eq.s32.totalorder %s22, 1
      %p181 = por %p179, %p180
      %p182 = scmp.ne.s32.totalorder %s174, %s177
      %p183 = scmp.eq.s32.totalorder %s22, 0
      %p184 = por %p182, %p183
      %p185 = scmp.ne.s32.totalorder %s174, %s177
      %p186 = scmp.eq.s32.totalorder %s27, 1
      %p187 = por %p185, %p186
      %p188 = scmp.ne.s32.totalorder %s177, %s178
      %p189 = scmp.eq.s32.totalorder %s27, 0
      %p190 = por %p188, %p189
      %p191 = scmp.ne.s32.totalorder %s177, %s178
      %p192 = scmp.eq.s32.totalorder %s28, 1
      %p193 = por %p191, %p192
      %p195 = scmp.ne.s32.totalorder %s178, %s194
      %p196 = scmp.eq.s32.totalorder %s28, 0
      %p197 = por %p195, %p196
      %s198 = ssub.s32 %s30, %s37
      %p199 = scmp.eq.s32.totalorder %s198, 0
      %s201 = sadd.s32 %s200, 1
      %s202 = scalar_select %p199, %s200, %s201
      %p205 = pneg %p199
      %p206 = scmp.eq.s32.totalorder %s22, 1
      %p207 = por %p205, %p206
      %p208 = scmp.ne.s32.totalorder %s200, %s203
      %p209 = scmp.eq.s32.totalorder %s22, 0
      %p210 = por %p208, %p209
      %p211 = scmp.ne.s32.totalorder %s200, %s203
      %p212 = scmp.eq.s32.totalorder %s27, 1
      %p213 = por %p211, %p212
      %p214 = scmp.ne.s32.totalorder %s203, %s204
      %p215 = scmp.eq.s32.totalorder %s27, 0
      %p216 = por %p214, %p215
      %p217 = scmp.ne.s32.totalorder %s203, %s204
      %p218 = scmp.eq.s32.totalorder %s28, 1
      %p219 = por %p217, %p218
      %p221 = scmp.ne.s32.totalorder %s204, %s220
      %p222 = scmp.eq.s32.totalorder %s28, 0
      %p223 = por %p221, %p222
      %s224 = ssub.s32 %s30, %s37
      %p225 = scmp.eq.s32.totalorder %s224, 0
      %s227 = sadd.s32 %s226, 1
      %s228 = scalar_select %p225, %s226, %s227
      %p231 = pneg %p225
      %p232 = scmp.eq.s32.totalorder %s22, 1
      %p233 = por %p231, %p232
      %p234 = scmp.ne.s32.totalorder %s226, %s229
      %p235 = scmp.eq.s32.totalorder %s22, 0
      %p236 = por %p234, %p235
      %p237 = scmp.ne.s32.totalorder %s226, %s229
      %p238 = scmp.eq.s32.totalorder %s27, 1
      %p239 = por %p237, %p238
      %p240 = scmp.ne.s32.totalorder %s229, %s230
      %p241 = scmp.eq.s32.totalorder %s27, 0
      %p242 = por %p240, %p241
      %p243 = scmp.ne.s32.totalorder %s229, %s230
      %p244 = scmp.eq.s32.totalorder %s28, 1
      %p245 = por %p243, %p244
      %p247 = scmp.ne.s32.totalorder %s230, %s246
      %p248 = scmp.eq.s32.totalorder %s28, 0
      %p249 = por %p247, %p248
      %s250 = ssub.s32 %s30, %s37
      %p251 = scmp.eq.s32.totalorder %s250, 0
      %s253 = sadd.s32 %s252, 1
      %s254 = scalar_select %p251, %s252, %s253
      %p257 = pneg %p251
      %p258 = scmp.eq.s32.totalorder %s22, 1
      %p259 = por %p257, %p258
      %p260 = scmp.ne.s32.totalorder %s252, %s255
      %p261 = scmp.eq.s32.totalorder %s22, 0
      %p262 = por %p260, %p261
      %p263 = scmp.ne.s32.totalorder %s252, %s255
      %p264 = scmp.eq.s32.totalorder %s27, 1
      %p265 = por %p263, %p264
      %p266 = scmp.ne.s32.totalorder %s255, %s256
      %p267 = scmp.eq.s32.totalorder %s27, 0
      %p268 = por %p266, %p267
      %p269 = scmp.ne.s32.totalorder %s255, %s256
      %p270 = scmp.eq.s32.totalorder %s28, 1
      %p271 = por %p269, %p270
      %p273 = scmp.ne.s32.totalorder %s256, %s272
      %p274 = scmp.eq.s32.totalorder %s28, 0
      %p275 = por %p273, %p274
      %s276 = ssub.s32 %s30, %s37
      %p277 = scmp.eq.s32.totalorder %s276, 0
      %s279 = sadd.s32 %s278, 1
      %s280 = scalar_select %p277, %s278, %s279
      %p283 = pneg %p277
      %p284 = scmp.eq.s32.totalorder %s22, 1
      %p285 = por %p283, %p284
      %p286 = scmp.ne.s32.totalorder %s278, %s281
      %p287 = scmp.eq.s32.totalorder %s22, 0
      %p288 = por %p286, %p287
      %p289 = scmp.ne.s32.totalorder %s278, %s281
      %p290 = scmp.eq.s32.totalorder %s27, 1
      %p291 = por %p289, %p290
      %p292 = scmp.ne.s32.totalorder %s281, %s282
      %p293 = scmp.eq.s32.totalorder %s27, 0
      %p294 = por %p292, %p293
      %p295 = scmp.ne.s32.totalorder %s281, %s282
      %p296 = scmp.eq.s32.totalorder %s28, 1
      %p297 = por %p295, %p296
      %p299 = scmp.ne.s32.totalorder %s282, %s298
      %p300 = scmp.eq.s32.totalorder %s28, 0
      %p301 = por %p299, %p300
      %s302 = ssub.s32 %s30, %s37
      %p303 = scmp.eq.s32.totalorder %s302, 0
      %s305 = sadd.s32 %s304, 1
      %s306 = scalar_select %p303, %s304, %s305
      %p309 = pneg %p303
      %p310 = scmp.eq.s32.totalorder %s22, 1
      %p311 = por %p309, %p310
      %p312 = scmp.ne.s32.totalorder %s304, %s307
      %p313 = scmp.eq.s32.totalorder %s22, 0
      %p314 = por %p312, %p313
      %p315 = scmp.ne.s32.totalorder %s304, %s307
      %p316 = scmp.eq.s32.totalorder %s27, 1
      %p317 = por %p315, %p316
      %p318 = scmp.ne.s32.totalorder %s307, %s308
      %p319 = scmp.eq.s32.totalorder %s27, 0
      %p320 = por %p318, %p319
      %p321 = scmp.ne.s32.totalorder %s307, %s308
      %p322 = scmp.eq.s32.totalorder %s28, 1
      %p323 = por %p321, %p322
      %p325 = scmp.ne.s32.totalorder %s308, %s324
      %p326 = scmp.eq.s32.totalorder %s28, 0
      %p327 = por %p325, %p326
      %s328 = ssub.s32 %s30, %s37
      %p329 = scmp.eq.s32.totalorder %s328, 0
      %s331 = sadd.s32 %s330, 1
      %s332 = scalar_select %p329, %s330, %s331
      %p335 = pneg %p329
      %p336 = scmp.eq.s32.totalorder %s22, 1
      %p337 = por %p335, %p336
      %p338 = scmp.ne.s32.totalorder %s330, %s333
      %p339 = scmp.eq.s32.totalorder %s22, 0
      %p340 = por %p338, %p339
      %p341 = scmp.ne.s32.totalorder %s330, %s333
      %p342 = scmp.eq.s32.totalorder %s27, 1
      %p343 = por %p341, %p342
      %p344 = scmp.ne.s32.totalorder %s333, %s334
      %p345 = scmp.eq.s32.totalorder %s27, 0
      %p346 = por %p344, %p345
      %p347 = scmp.ne.s32.totalorder %s333, %s334
      %p348 = scmp.eq.s32.totalorder %s28, 1
      %p349 = por %p347, %p348
      %p351 = scmp.ne.s32.totalorder %s334, %s350
      %p352 = scmp.eq.s32.totalorder %s28, 0
      %p353 = por %p351, %p352
      %s354 = ssub.s32 %s30, %s37
      %p355 = scmp.eq.s32.totalorder %s354, 0
      %s357 = sadd.s32 %s356, 1
      %s358 = scalar_select %p355, %s356, %s357
      %p361 = pneg %p355
      %p362 = scmp.eq.s32.totalorder %s22, 1
      %p363 = por %p361, %p362
      %p364 = scmp.ne.s32.totalorder %s356, %s359
      %p365 = scmp.eq.s32.totalorder %s22, 0
      %p366 = por %p364, %p365
      %p367 = scmp.ne.s32.totalorder %s356, %s359
      %p368 = scmp.eq.s32.totalorder %s27, 1
      %p369 = por %p367, %p368
      %p370 = scmp.ne.s32.totalorder %s359, %s360
      %p371 = scmp.eq.s32.totalorder %s27, 0
      %p372 = por %p370, %p371
      %p373 = scmp.ne.s32.totalorder %s359, %s360
      %p374 = scmp.eq.s32.totalorder %s28, 1
      %p375 = por %p373, %p374
      %p377 = scmp.ne.s32.totalorder %s360, %s376
      %p378 = scmp.eq.s32.totalorder %s28, 0
      %p379 = por %p377, %p378
      %s380 = ssub.s32 %s30, %s37
      %p381 = scmp.eq.s32.totalorder %s380, 0
      %s383 = sadd.s32 %s382, 1
      %s384 = scalar_select %p381, %s382, %s383
      %p387 = pneg %p381
      %p388 = scmp.eq.s32.totalorder %s22, 1
      %p389 = por %p387, %p388
      %p390 = scmp.ne.s32.totalorder %s382, %s385
      %p391 = scmp.eq.s32.totalorder %s22, 0
      %p392 = por %p390, %p391
      %p393 = scmp.ne.s32.totalorder %s382, %s385
      %p394 = scmp.eq.s32.totalorder %s27, 1
      %p395 = por %p393, %p394
      %p396 = scmp.ne.s32.totalorder %s385, %s386
      %p397 = scmp.eq.s32.totalorder %s27, 0
      %p398 = por %p396, %p397
      %p399 = scmp.ne.s32.totalorder %s385, %s386
      %p400 = scmp.eq.s32.totalorder %s28, 1
      %p401 = por %p399, %p400
      %p403 = scmp.ne.s32.totalorder %s386, %s402
      %p404 = scmp.eq.s32.totalorder %s28, 0
      %p405 = por %p403, %p404
      %s406 = ssub.s32 %s30, %s37
      %p407 = scmp.eq.s32.totalorder %s406, 0
      %s409 = sadd.s32 %s408, 1
      %s410 = scalar_select %p407, %s408, %s409
      %p413 = pneg %p407
      %p414 = scmp.eq.s32.totalorder %s22, 1
      %p415 = por %p413, %p414
      %p416 = scmp.ne.s32.totalorder %s408, %s411
      %p417 = scmp.eq.s32.totalorder %s22, 0
      %p418 = por %p416, %p417
      %p419 = scmp.ne.s32.totalorder %s408, %s411
      %p420 = scmp.eq.s32.totalorder %s27, 1
      %p421 = por %p419, %p420
      %p422 = scmp.ne.s32.totalorder %s411, %s412
      %p423 = scmp.eq.s32.totalorder %s27, 0
      %p424 = por %p422, %p423
      %p425 = scmp.ne.s32.totalorder %s411, %s412
      %p426 = scmp.eq.s32.totalorder %s28, 1
      %p427 = por %p425, %p426
      %p429 = scmp.ne.s32.totalorder %s412, %s428
      %p430 = scmp.eq.s32.totalorder %s28, 0
      %p431 = por %p429, %p430
      %s432 = ssub.s32 %s29, %s41
      %p433 = scmp.eq.s32.totalorder %s432, 0
      %s435 = sadd.s32 %s434, 1
      %s436 = scalar_select %p433, %s434, %s435
      %p439 = pneg %p433
      %p440 = scmp.eq.s32.totalorder %s22, 1
      %p441 = por %p439, %p440
      %p442 = scmp.ne.s32.totalorder %s434, %s437
      %p443 = scmp.eq.s32.totalorder %s22, 0
      %p444 = por %p442, %p443
      %p445 = scmp.ne.s32.totalorder %s434, %s437
      %p446 = scmp.eq.s32.totalorder %s27, 1
      %p447 = por %p445, %p446
      %p448 = scmp.ne.s32.totalorder %s437, %s438
      %p449 = scmp.eq.s32.totalorder %s27, 0
      %p450 = por %p448, %p449
      %p451 = scmp.ne.s32.totalorder %s437, %s438
      %p452 = scmp.eq.s32.totalorder %s28, 1
      %p453 = por %p451, %p452
      %p455 = scmp.ne.s32.totalorder %s438, %s454
      %p456 = scmp.eq.s32.totalorder %s28, 0
      %p457 = por %p455, %p456
      %p458 = scmp.le.s32.totalorder 1, %s22
      %p459 = scmp.lt.s32.totalorder %s22, 3
      %p460 = pnand %p458, %p459
      %p461 = pneg %p460
      // Predicated region
      $region9: #{tpu_custom_call.1} parent=5 // pred_check
        _
      $region10: #{tpu_custom_call.1} parent=5 // pred_check_branch
        %463 = sbr.rel (%p460) target = $region12
      $region11: #{tpu_custom_call.1} parent=5 // pred_region
        %s464 = ssub.s32 %s22, 1
        // Predicated region
        $region13: #{tpu_custom_call.1} parent=11 // pred_check
          %p465 = pneg %p60
        $region14: #{tpu_custom_call.1} parent=11 // pred_check_branch
          %467 = sbr.rel (%p465) target = $region16
        $region15: #{tpu_custom_call.1} parent=11 // pred_region
          %s468 = smul.u32 2, %s31
          %p469 = scmp.lt.s32.totalorder %s468, 1
          %s470 = scalar_select %p469, %s468, 1
          %s471 = smul.addr %s470, 8
          %s472 = scalar_lea.vmem %s0, %s471
          %s473 = smul.u32 2, %s31
        $region16: #{tpu_custom_call.1} parent=11 // pred_fallthru
          _
      $region12: #{tpu_custom_call.1} parent=5 // pred_fallthru
        _
      %p474 = scmp.lt.s32.totalorder %s22, 2
      // Predicated region
      $region17: #{tpu_custom_call.1} parent=5 // pred_check
        %p475 = pneg %p474
      $region18: #{tpu_custom_call.1} parent=5 // pred_check_branch
        %477 = sbr.rel (%p475) target = $region20
      $region19: #{tpu_custom_call.1} parent=5 // pred_region
        // Predicated region
        $region21: #{tpu_custom_call.1} parent=19 // pred_check
          %p478 = pneg %p80
        $region22: #{tpu_custom_call.1} parent=19 // pred_check_branch
          %480 = sbr.rel (%p478) target = $region24
        $region23: #{tpu_custom_call.1} parent=19 // pred_region
          %p481 = scmp.lt.s32.totalorder %s30, 1
          %s482 = scalar_select %p481, %s30, 1
          %s483 = scalar_lea.vmem %s1, %s482
        $region24: #{tpu_custom_call.1} parent=19 // pred_fallthru
          _
        // Predicated region
        $region25: #{tpu_custom_call.1} parent=19 // pred_check
          %p484 = pneg %p106
        $region26: #{tpu_custom_call.1} parent=19 // pred_check_branch
          %486 = sbr.rel (%p484) target = $region28
        $region27: #{tpu_custom_call.1} parent=19 // pred_region
          %p487 = scmp.lt.s32.totalorder %s30, 1
          %s488 = scalar_select %p487, %s30, 1
          %s489 = scalar_lea.vmem %s2, %s488
        $region28: #{tpu_custom_call.1} parent=19 // pred_fallthru
          _
        // Predicated region
        $region29: #{tpu_custom_call.1} parent=19 // pred_check
          %p490 = pneg %p132
        $region30: #{tpu_custom_call.1} parent=19 // pred_check_branch
          %492 = sbr.rel (%p490) target = $region32
        $region31: #{tpu_custom_call.1} parent=19 // pred_region
          %p493 = scmp.lt.s32.totalorder %s30, 1
          %s494 = scalar_select %p493, %s30, 1
          %s495 = smul.addr %s494, 4
          %s496 = smul.addr %s495, 4
          %s497 = scalar_lea.vmem %s3, %s496
        $region32: #{tpu_custom_call.1} parent=19 // pred_fallthru
          _
        // Predicated region
        $region33: #{tpu_custom_call.1} parent=19 // pred_check
          %p498 = pneg %p158
        $region34: #{tpu_custom_call.1} parent=19 // pred_check_branch
          %500 = sbr.rel (%p498) target = $region36
        $region35: #{tpu_custom_call.1} parent=19 // pred_region
          %p501 = scmp.lt.s32.totalorder %s30, 1
          %s502 = scalar_select %p501, %s30, 1
          %s503 = scalar_lea.vmem %s4, %s502
        $region36: #{tpu_custom_call.1} parent=19 // pred_fallthru
          _
        // Predicated region
        $region37: #{tpu_custom_call.1} parent=19 // pred_check
          %p504 = pneg %p184
        $region38: #{tpu_custom_call.1} parent=19 // pred_check_branch
          %506 = sbr.rel (%p504) target = $region40
        $region39: #{tpu_custom_call.1} parent=19 // pred_region
          %p507 = scmp.lt.s32.totalorder %s30, 1
          %s508 = scalar_select %p507, %s30, 1
          %s509 = smul.addr %s508, 4
          %s510 = smul.addr %s509, 4
          %s511 = scalar_lea.vmem %s5, %s510
        $region40: #{tpu_custom_call.1} parent=19 // pred_fallthru
          _
        // Predicated region
        $region41: #{tpu_custom_call.1} parent=19 // pred_check
          %p512 = pneg %p210
        $region42: #{tpu_custom_call.1} parent=19 // pred_check_branch
          %514 = sbr.rel (%p512) target = $region44
        $region43: #{tpu_custom_call.1} parent=19 // pred_region
          %p515 = scmp.lt.s32.totalorder %s30, 1
          %s516 = scalar_select %p515, %s30, 1
          %s517 = scalar_lea.vmem %s6, %s516
        $region44: #{tpu_custom_call.1} parent=19 // pred_fallthru
          _
        // Predicated region
        $region45: #{tpu_custom_call.1} parent=19 // pred_check
          %p518 = pneg %p236
        $region46: #{tpu_custom_call.1} parent=19 // pred_check_branch
          %520 = sbr.rel (%p518) target = $region48
        $region47: #{tpu_custom_call.1} parent=19 // pred_region
          %p521 = scmp.lt.s32.totalorder %s30, 1
          %s522 = scalar_select %p521, %s30, 1
          %s523 = scalar_lea.vmem %s7, %s522
        $region48: #{tpu_custom_call.1} parent=19 // pred_fallthru
          _
        // Predicated region
        $region49: #{tpu_custom_call.1} parent=19 // pred_check
          %p524 = pneg %p262
        $region50: #{tpu_custom_call.1} parent=19 // pred_check_branch
          %526 = sbr.rel (%p524) target = $region52
        $region51: #{tpu_custom_call.1} parent=19 // pred_region
          %p527 = scmp.lt.s32.totalorder %s30, 1
          %s528 = scalar_select %p527, %s30, 1
          %s529 = scalar_lea.vmem %s8, %s528
        $region52: #{tpu_custom_call.1} parent=19 // pred_fallthru
          _
        // Predicated region
        $region53: #{tpu_custom_call.1} parent=19 // pred_check
          %p530 = pneg %p288
        $region54: #{tpu_custom_call.1} parent=19 // pred_check_branch
          %532 = sbr.rel (%p530) target = $region56
        $region55: #{tpu_custom_call.1} parent=19 // pred_region
          %p533 = scmp.lt.s32.totalorder %s30, 1
          %s534 = scalar_select %p533, %s30, 1
          %s535 = scalar_lea.vmem %s9, %s534
        $region56: #{tpu_custom_call.1} parent=19 // pred_fallthru
          _
        // Predicated region
        $region57: #{tpu_custom_call.1} parent=19 // pred_check
          %p536 = pneg %p314
        $region58: #{tpu_custom_call.1} parent=19 // pred_check_branch
          %538 = sbr.rel (%p536) target = $region60
        $region59: #{tpu_custom_call.1} parent=19 // pred_region
          %p539 = scmp.lt.s32.totalorder %s30, 1
          %s540 = scalar_select %p539, %s30, 1
          %s541 = smul.addr %s540, 4
          %s542 = smul.addr %s541, 4
          %s543 = scalar_lea.vmem %s10, %s542
        $region60: #{tpu_custom_call.1} parent=19 // pred_fallthru
          _
        // Predicated region
        $region61: #{tpu_custom_call.1} parent=19 // pred_check
          %p544 = pneg %p340
        $region62: #{tpu_custom_call.1} parent=19 // pred_check_branch
          %546 = sbr.rel (%p544) target = $region64
        $region63: #{tpu_custom_call.1} parent=19 // pred_region
          %p547 = scmp.lt.s32.totalorder %s30, 1
          %s548 = scalar_select %p547, %s30, 1
          %s549 = scalar_lea.vmem %s11, %s548
        $region64: #{tpu_custom_call.1} parent=19 // pred_fallthru
          _
        // Predicated region
        $region65: #{tpu_custom_call.1} parent=19 // pred_check
          %p550 = pneg %p366
        $region66: #{tpu_custom_call.1} parent=19 // pred_check_branch
          %552 = sbr.rel (%p550) target = $region68
        $region67: #{tpu_custom_call.1} parent=19 // pred_region
          %p553 = scmp.lt.s32.totalorder %s30, 1
          %s554 = scalar_select %p553, %s30, 1
          %s555 = smul.addr %s554, 16
          %s556 = smul.addr %s555, 4
          %s557 = scalar_lea.vmem %s12, %s556
        $region68: #{tpu_custom_call.1} parent=19 // pred_fallthru
          _
        // Predicated region
        $region69: #{tpu_custom_call.1} parent=19 // pred_check
          %p558 = pneg %p392
        $region70: #{tpu_custom_call.1} parent=19 // pred_check_branch
          %560 = sbr.rel (%p558) target = $region72
        $region71: #{tpu_custom_call.1} parent=19 // pred_region
          %p561 = scmp.lt.s32.totalorder %s30, 1
          %s562 = scalar_select %p561, %s30, 1
          %s563 = scalar_lea.vmem %s13, %s562
        $region72: #{tpu_custom_call.1} parent=19 // pred_fallthru
          _
        // Predicated region
        $region73: #{tpu_custom_call.1} parent=19 // pred_check
          %p564 = pneg %p418
        $region74: #{tpu_custom_call.1} parent=19 // pred_check_branch
          %566 = sbr.rel (%p564) target = $region76
        $region75: #{tpu_custom_call.1} parent=19 // pred_region
          %p567 = scmp.lt.s32.totalorder %s30, 1
          %s568 = scalar_select %p567, %s30, 1
          %s569 = scalar_lea.vmem %s14, %s568
        $region76: #{tpu_custom_call.1} parent=19 // pred_fallthru
          _
      $region20: #{tpu_custom_call.1} parent=5 // pred_fallthru
        _
      %p570 = scmp.le.s32.totalorder 1, %s22
      %p571 = scmp.lt.s32.totalorder %s22, 3
      %p572 = pnand %p570, %p571
      %p573 = pneg %p572
      // Predicated region
      $region77: #{tpu_custom_call.1} parent=5 // pred_check
        _
      $region78: #{tpu_custom_call.1} parent=5 // pred_check_branch
        %575 = sbr.rel (%p572) target = $region80
      $region79: #{tpu_custom_call.1} parent=5 // pred_region
        %s576 = ssub.s32 %s22, 1
        %s577 = smul.u32 2, %s31
        %p578 = scmp.lt.s32.totalorder %s577, 1
        %s579 = scalar_select %p578, %s577, 1
        %s580 = smul.addr %s579, 8
        %s581 = scalar_lea.vmem %s0, %s580
        %p582 = pneg %p60
        %p583 = pneg %p57
        %p584 = scmp.lt.s32.totalorder %s32, 1
        %s585 = scalar_select %p584, %s32, 1
        %s586 = scalar_lea.vmem %s1, %s585
        %p587 = pneg %p86
        %p588 = pneg %p83
        %p589 = scmp.lt.s32.totalorder %s32, 1
        %s590 = scalar_select %p589, %s32, 1
        %s591 = scalar_lea.vmem %s2, %s590
        %p592 = pneg %p112
        %p593 = pneg %p109
        %p594 = scmp.lt.s32.totalorder %s32, 1
        %s595 = scalar_select %p594, %s32, 1
        %s596 = smul.addr %s595, 4
        %s597 = smul.addr %s596, 4
        %s598 = scalar_lea.vmem %s3, %s597
        %p599 = pneg %p138
        %p600 = pneg %p135
        %p601 = scmp.lt.s32.totalorder %s32, 1
        %s602 = scalar_select %p601, %s32, 1
        %s603 = scalar_lea.vmem %s4, %s602
        %p604 = pneg %p164
        %p605 = pneg %p161
        %p606 = scmp.lt.s32.totalorder %s32, 1
        %s607 = scalar_select %p606, %s32, 1
        %s608 = smul.addr %s607, 4
        %s609 = smul.addr %s608, 4
        %s610 = scalar_lea.vmem %s5, %s609
        %p611 = pneg %p190
        %p612 = pneg %p187
        %p613 = scmp.lt.s32.totalorder %s32, 1
        %s614 = scalar_select %p613, %s32, 1
        %s615 = scalar_lea.vmem %s6, %s614
        %p616 = pneg %p216
        %p617 = pneg %p213
        %p618 = scmp.lt.s32.totalorder %s32, 1
        %s619 = scalar_select %p618, %s32, 1
        %s620 = scalar_lea.vmem %s7, %s619
        %p621 = pneg %p242
        %p622 = pneg %p239
        %p623 = scmp.lt.s32.totalorder %s32, 1
        %s624 = scalar_select %p623, %s32, 1
        %s625 = scalar_lea.vmem %s8, %s624
        %p626 = pneg %p268
        %p627 = pneg %p265
        %p628 = scmp.lt.s32.totalorder %s32, 1
        %s629 = scalar_select %p628, %s32, 1
        %s630 = scalar_lea.vmem %s9, %s629
        %p631 = pneg %p294
        %p632 = pneg %p291
        %p633 = scmp.lt.s32.totalorder %s32, 1
        %s634 = scalar_select %p633, %s32, 1
        %s635 = smul.addr %s634, 4
        %s636 = smul.addr %s635, 4
        %s637 = scalar_lea.vmem %s10, %s636
        %p638 = pneg %p320
        %p639 = pneg %p317
        %p640 = scmp.lt.s32.totalorder %s32, 1
        %s641 = scalar_select %p640, %s32, 1
        %s642 = scalar_lea.vmem %s11, %s641
        %p643 = pneg %p346
        %p644 = pneg %p343
        %p645 = scmp.lt.s32.totalorder %s32, 1
        %s646 = scalar_select %p645, %s32, 1
        %s647 = smul.addr %s646, 16
        %s648 = smul.addr %s647, 4
        %s649 = scalar_lea.vmem %s12, %s648
        %p650 = pneg %p372
        %p651 = pneg %p369
        %p652 = scmp.lt.s32.totalorder %s32, 1
        %s653 = scalar_select %p652, %s32, 1
        %s654 = scalar_lea.vmem %s13, %s653
        %p655 = pneg %p398
        %p656 = pneg %p395
        %p657 = scmp.lt.s32.totalorder %s32, 1
        %s658 = scalar_select %p657, %s32, 1
        %s659 = scalar_lea.vmem %s14, %s658
        %p660 = pneg %p424
        %p661 = pneg %p421
        %p662 = pneg %p450
        %p663 = pneg %p447
        %s664 = smul.u32 2, %s31
        %p665 = scmp.lt.s32.totalorder %s664, 1
        %s666 = scalar_select %p665, %s664, 1
        %s667 = smul.addr %s666, 8
        %s668 = scalar_lea.vmem %s0, %s667
        %s669 = smul.u32 2, %s31
        %p670 = scmp.lt.s32.totalorder %s32, 1
        %s671 = scalar_select %p670, %s32, 1
        %s672 = scalar_lea.vmem %s1, %s671
        %p673 = scmp.lt.s32.totalorder %s32, 1
        %s674 = scalar_select %p673, %s32, 1
        %s675 = scalar_lea.vmem %s2, %s674
        %p676 = scmp.lt.s32.totalorder %s32, 1
        %s677 = scalar_select %p676, %s32, 1
        %s678 = smul.addr %s677, 4
        %s679 = smul.addr %s678, 4
        %s680 = scalar_lea.vmem %s3, %s679
        %p681 = scmp.lt.s32.totalorder %s32, 1
        %s682 = scalar_select %p681, %s32, 1
        %s683 = scalar_lea.vmem %s4, %s682
        %p684 = scmp.lt.s32.totalorder %s32, 1
        %s685 = scalar_select %p684, %s32, 1
        %s686 = smul.addr %s685, 4
        %s687 = smul.addr %s686, 4
        %s688 = scalar_lea.vmem %s5, %s687
        %p689 = scmp.lt.s32.totalorder %s32, 1
        %s690 = scalar_select %p689, %s32, 1
        %s691 = scalar_lea.vmem %s6, %s690
        %p692 = scmp.lt.s32.totalorder %s32, 1
        %s693 = scalar_select %p692, %s32, 1
        %s694 = scalar_lea.vmem %s7, %s693
        %p695 = scmp.lt.s32.totalorder %s32, 1
        %s696 = scalar_select %p695, %s32, 1
        %s697 = scalar_lea.vmem %s8, %s696
        %p698 = scmp.lt.s32.totalorder %s32, 1
        %s699 = scalar_select %p698, %s32, 1
        %s700 = scalar_lea.vmem %s9, %s699
        %p701 = scmp.lt.s32.totalorder %s32, 1
        %s702 = scalar_select %p701, %s32, 1
        %s703 = smul.addr %s702, 4
        %s704 = smul.addr %s703, 4
        %s705 = scalar_lea.vmem %s10, %s704
        %p706 = scmp.lt.s32.totalorder %s32, 1
        %s707 = scalar_select %p706, %s32, 1
        %s708 = scalar_lea.vmem %s11, %s707
        %p709 = scmp.lt.s32.totalorder %s32, 1
        %s710 = scalar_select %p709, %s32, 1
        %s711 = smul.addr %s710, 16
        %s712 = smul.addr %s711, 4
        %s713 = scalar_lea.vmem %s12, %s712
        %p714 = scmp.lt.s32.totalorder %s32, 1
        %s715 = scalar_select %p714, %s32, 1
        %s716 = scalar_lea.vmem %s13, %s715
        %p717 = scmp.lt.s32.totalorder %s32, 1
        %s718 = scalar_select %p717, %s32, 1
        %s719 = scalar_lea.vmem %s14, %s718
        %s720 = smul.u32 2, %s31
        %p722 = scmp.eq.s32.totalorder %s32, 0
        // Predicated region
        $region81: #{tpu_custom_call.1} parent=79 // pred_check
          %p723 = pneg %p722
        $region82: #{tpu_custom_call.1} parent=79 // pred_check_branch
          %725 = sbr.rel (%p723) target = $region84
        $region83: #{tpu_custom_call.1} parent=79 // pred_region
          %v726 = vld [vmem:[%s668] sm:$0xff]
          %v727 = vld [vmem:[%s668 + $0x8] sm:$0xff]
          %vm728 = vcmask 261120
          %729 = vst.msk [vmem:[#allocation2] sm:$0xff] %vm728, %v726
          %730 = vst.msk [vmem:[#allocation2 + $0x8] sm:$0xff] %vm728, %v727
        $region84: #{tpu_custom_call.1} parent=79 // pred_fallthru
          _
        %v731 = vld [vmem:[#allocation2] sm:$0xff]
        %v732 = vld [vmem:[#allocation2 + $0x8] sm:$0xff]
        %v733 = vld [vmem:[%s672] sm:$0x1]
        %v734 = vld [vmem:[%s675] sm:$0x1]
        %vm735 = vcmask 261120
        %v736 = vsel %vm735, %v731, 0.0
        %737 = vadd.xlane.f32.xlu0 %v736
        %v738 = vpop.xlane.xlu0 %737
        %v739 = vsel %vm735, %v732, 0.0
        %740 = vadd.xlane.f32.xlu0 %v739
        %v741 = vpop.xlane.xlu0 %740
        %v742 = vrcp.pop 32.0
        %v743 = vmul.f32 %v738, %v742
        %v744 = vmul.f32 %v741, %v742
        %v745 = vsub.f32 %v731, %v743
        %v746 = vsub.f32 %v732, %v744
        %v747 = vmul.f32 %v745, %v745
        %v748 = vmul.f32 %v746, %v746
        %v749 = vsel %vm735, %v747, 0.0
        %750 = vadd.xlane.f32.xlu0 %v749
        %v751 = vpop.xlane.xlu0 %750
        %v752 = vsel %vm735, %v748, 0.0
        %753 = vadd.xlane.f32.xlu0 %v752
        %v754 = vpop.xlane.xlu0 %753
        %v755 = vmul.f32 %v751, %v742
        %v756 = vmul.f32 %v754, %v742
        %v757 = vadd.f32 %v755, 1e-12
        %v758 = vadd.f32 %v756, 1e-12
        %v759 = vrsqrt.pop %v757
        %v760 = vrsqrt.pop %v758
        %v761 = vmul.f32 %v745, %v759
        %v762 = vmul.f32 %v746, %v760
        %v764 = vlaneseq
        %v765 = vshrl.u32 %v764, 7
        %v766 = vsub.s32 0, %v765
        %v767 = vrot.slane %v733, %v766
        %v769 = vmul.f32 %v761, %v767
        %v770 = vmul.f32 %v762, %v767
        %v772 = vlaneseq
        %v773 = vshrl.u32 %v772, 7
        %v774 = vsub.s32 0, %v773
        %v775 = vrot.slane %v734, %v774
        %v777 = vadd.f32 %v769, %v775
        %v778 = vadd.f32 %v770, %v775
        %v779 = vpack.c.bf16 %v778, %v777
        %v780 = vld [vmem:[%s680] sm:$0xf]
        %v781 = vld [vmem:[%s680 + $0x4] sm:$0xf]
        %v782 = vld [vmem:[%s680 + $0x8] sm:$0xf]
        %v783 = vld [vmem:[%s680 + $0xc] sm:$0xf]
        %v784 = vld [vmem:[%s683] sm:$0x1]
        %v786 = vlaneseq
        %v787 = vshrl.u32 %v786, 7
        %v788 = vsub.s32 0, %v787
        %v789 = vrot.slane %v784, %v788
        %v795 = vunpack.c.l.b16 %v780
        %v796 = vunpack.c.l.b16 %v781
        %v797 = vunpack.c.l.b16 %v782
        %v798 = vunpack.c.l.b16 %v783
        %v799 = vpack.c.b16 %v796, %v795
        %v800 = vpack.c.b16 %v798, %v797
        %v804 = vsel %vm735, %v779, 0
        %806 = vmatprep.subr.bf16.mxu0 0
        %807 = vmatpush1.bf16.msra.mxu0 %v799
        %808 = vmatprep.subr.bf16.mxu0 0
        %809 = vmatpush1.bf16.msra.mxu0 %v800
        %810 = vmatprep.subr.bf16.mxu0 0
        %811 = vmatpush1.bf16.msra.mxu0 0
        %812 = vmatprep.subr.bf16.mxu0 0
        %813 = vmatpush1.bf16.msra.mxu0 0
        %814 = vmatprep.subr.bf16.mxu0 0
        %815 = vmatpush1.bf16.msra.mxu0 0
        %816 = vmatprep.subr.bf16.mxu0 0
        %817 = vmatpush1.bf16.msra.mxu0 0
        %818 = vmatprep.subr.bf16.mxu0 0
        %819 = vmatpush1.bf16.msra.mxu0 0
        %820 = vmatprep.subr.bf16.mxu0 0
        %821 = vmatpush1.bf16.msra.mxu0 0
        %822 = vmatprep.subr.bf16.mxu0 0
        %823 = vmatpush1.bf16.msra.mxu0 0
        %824 = vmatprep.subr.bf16.mxu0 0
        %825 = vmatpush1.bf16.msra.mxu0 0
        %826 = vmatprep.subr.bf16.mxu0 0
        %827 = vmatpush1.bf16.msra.mxu0 0
        %828 = vmatprep.subr.bf16.mxu0 0
        %829 = vmatpush1.bf16.msra.mxu0 0
        %830 = vmatprep.subr.bf16.mxu0 0
        %831 = vmatpush1.bf16.msra.mxu0 0
        %832 = vmatprep.subr.bf16.mxu0 0
        %833 = vmatpush1.bf16.msra.mxu0 0
        %834 = vmatprep.subr.bf16.mxu0 0
        %835 = vmatpush1.bf16.msra.mxu0 0
        %836 = vmatprep.subr.bf16.mxu0 0
        %837 = vmatpush1.bf16.msra.mxu0 0
        %838 = vmatprep.mubr.bf16.mxu0 0
        %839 = vmatmul.mubr.bf16.gmra.mrb[0].mxu0 %v804
        %v840 = vpop.f32.mrb[0].mxu0
        %v841 = vadd.f32 %v789, %v840
        %v842 = vpop.f32.mrb[0].mxu0
        %v843 = vpop.f32.mrb[0].mxu0
        %v844 = vadd.f32 %v789, %v843
        %v845 = vpop.f32.mrb[0].mxu0
        %846 = vdwg.mxu0
        %v847 = vpack.c.bf16 %v844, %v841
        %849 = vrot.lane.b32.xlu0 %v847, 120
        %v850 = vpop.permute.xlu0 %849
        %851 = vrot.lane.b32.xlu0 %v847, 112
        %v852 = vpop.permute.xlu0 %851
        %853 = vrot.lane.b32.xlu0 %v847, 104
        %v854 = vpop.permute.xlu0 %853
        %v855 = vrot.slane %v847, 4
        %856 = vrot.lane.b32.xlu0 %v855, 120
        %v857 = vpop.permute.xlu0 %856
        %858 = vrot.lane.b32.xlu0 %v855, 112
        %v859 = vpop.permute.xlu0 %858
        %860 = vrot.lane.b32.xlu0 %v855, 104
        %v861 = vpop.permute.xlu0 %860
        %862 = vrot.lane.b32.xlu0 %v847, 96
        %v863 = vpop.permute.xlu0 %862
        %vm864 = vcmask 64512
        %v866 = vsel %vm864, %v847, 0
        %v869 = vsel %vm864, %v863, 0
        %871 = vmatprep.subr.bf16.mxu0 0
        %872 = vmatpush1.bf16.xpose.msra.mxu0 %v869
        %873 = vmatprep.subr.bf16.mxu0 0
        %874 = vmatpush1.bf16.xpose.msra.mxu0 0
        %875 = vmatprep.subr.bf16.mxu0 0
        %876 = vmatpush1.bf16.xpose.msra.mxu0 0
        %877 = vmatprep.subr.bf16.mxu0 0
        %878 = vmatpush1.bf16.xpose.msra.mxu0 0
        %879 = vmatprep.subr.bf16.mxu0 0
        %880 = vmatpush1.bf16.xpose.msra.mxu0 0
        %881 = vmatprep.subr.bf16.mxu0 0
        %882 = vmatpush1.bf16.xpose.msra.mxu0 0
        %883 = vmatprep.subr.bf16.mxu0 0
        %884 = vmatpush1.bf16.xpose.msra.mxu0 0
        %885 = vmatprep.subr.bf16.mxu0 0
        %886 = vmatpush1.bf16.xpose.msra.mxu0 0
        %887 = vmatprep.subr.bf16.mxu0 0
        %888 = vmatpush1.bf16.xpose.msra.mxu0 0
        %889 = vmatprep.subr.bf16.mxu0 0
        %890 = vmatpush1.bf16.xpose.msra.mxu0 0
        %891 = vmatprep.subr.bf16.mxu0 0
        %892 = vmatpush1.bf16.xpose.msra.mxu0 0
        %893 = vmatprep.subr.bf16.mxu0 0
        %894 = vmatpush1.bf16.xpose.msra.mxu0 0
        %895 = vmatprep.subr.bf16.mxu0 0
        %896 = vmatpush1.bf16.xpose.msra.mxu0 0
        %897 = vmatprep.subr.bf16.mxu0 0
        %898 = vmatpush1.bf16.xpose.msra.mxu0 0
        %899 = vmatprep.subr.bf16.mxu0 0
        %900 = vmatpush1.bf16.xpose.msra.mxu0 0
        %901 = vmatprep.subr.bf16.mxu0 0
        %902 = vmatpush1.bf16.xpose.msra.mxu0 0
        %903 = vmatprep.mubr.bf16.mxu0 0
        %904 = vmatmul.mubr.bf16.gmra.mrb[0].mxu0 %v866
        %v905 = vpop.f32.mrb[0].mxu0
        %v906 = vadd.f32 0.0, %v905
        %v907 = vpop.f32.mrb[0].mxu0
        %v908 = vpop.f32.mrb[0].mxu0
        %v909 = vpop.f32.mrb[0].mxu0
        %910 = vdwg.mxu0
        %911 = vrot.lane.b32.xlu0 %v850, 96
        %v912 = vpop.permute.xlu0 %911
        %v914 = vsel %vm864, %v850, 0
        %v917 = vsel %vm864, %v912, 0
        %919 = vmatprep.subr.bf16.mxu0 0
        %920 = vmatpush1.bf16.xpose.msra.mxu0 %v917
        %921 = vmatprep.subr.bf16.mxu0 0
        %922 = vmatpush1.bf16.xpose.msra.mxu0 0
        %923 = vmatprep.subr.bf16.mxu0 0
        %924 = vmatpush1.bf16.xpose.msra.mxu0 0
        %925 = vmatprep.subr.bf16.mxu0 0
        %926 = vmatpush1.bf16.xpose.msra.mxu0 0
        %927 = vmatprep.subr.bf16.mxu0 0
        %928 = vmatpush1.bf16.xpose.msra.mxu0 0
        %929 = vmatprep.subr.bf16.mxu0 0
        %930 = vmatpush1.bf16.xpose.msra.mxu0 0
        %931 = vmatprep.subr.bf16.mxu0 0
        %932 = vmatpush1.bf16.xpose.msra.mxu0 0
        %933 = vmatprep.subr.bf16.mxu0 0
        %934 = vmatpush1.bf16.xpose.msra.mxu0 0
        %935 = vmatprep.subr.bf16.mxu0 0
        %936 = vmatpush1.bf16.xpose.msra.mxu0 0
        %937 = vmatprep.subr.bf16.mxu0 0
        %938 = vmatpush1.bf16.xpose.msra.mxu0 0
        %939 = vmatprep.subr.bf16.mxu0 0
        %940 = vmatpush1.bf16.xpose.msra.mxu0 0
        %941 = vmatprep.subr.bf16.mxu0 0
        %942 = vmatpush1.bf16.xpose.msra.mxu0 0
        %943 = vmatprep.subr.bf16.mxu0 0
        %944 = vmatpush1.bf16.xpose.msra.mxu0 0
        %945 = vmatprep.subr.bf16.mxu0 0
        %946 = vmatpush1.bf16.xpose.msra.mxu0 0
        %947 = vmatprep.subr.bf16.mxu0 0
        %948 = vmatpush1.bf16.xpose.msra.mxu0 0
        %949 = vmatprep.subr.bf16.mxu0 0
        %950 = vmatpush1.bf16.xpose.msra.mxu0 0
        %951 = vmatprep.mubr.bf16.mxu0 0
        %952 = vmatmul.mubr.bf16.gmra.mrb[0].mxu0 %v914
        %v953 = vpop.f32.mrb[0].mxu0
        %v954 = vadd.f32 0.0, %v953
        %v955 = vpop.f32.mrb[0].mxu0
        %v956 = vpop.f32.mrb[0].mxu0
        %v957 = vpop.f32.mrb[0].mxu0
        %958 = vdwg.mxu0
        %959 = vrot.lane.b32.xlu0 %v852, 96
        %v960 = vpop.permute.xlu0 %959
        %v962 = vsel %vm864, %v852, 0
        %v965 = vsel %vm864, %v960, 0
        %967 = vmatprep.subr.bf16.mxu0 0
        %968 = vmatpush1.bf16.xpose.msra.mxu0 %v965
        %969 = vmatprep.subr.bf16.mxu0 0
        %970 = vmatpush1.bf16.xpose.msra.mxu0 0
        %971 = vmatprep.subr.bf16.mxu0 0
        %972 = vmatpush1.bf16.xpose.msra.mxu0 0
        %973 = vmatprep.subr.bf16.mxu0 0
        %974 = vmatpush1.bf16.xpose.msra.mxu0 0
        %975 = vmatprep.subr.bf16.mxu0 0
        %976 = vmatpush1.bf16.xpose.msra.mxu0 0
        %977 = vmatprep.subr.bf16.mxu0 0
        %978 = vmatpush1.bf16.xpose.msra.mxu0 0
        %979 = vmatprep.subr.bf16.mxu0 0
        %980 = vmatpush1.bf16.xpose.msra.mxu0 0
        %981 = vmatprep.subr.bf16.mxu0 0
        %982 = vmatpush1.bf16.xpose.msra.mxu0 0
        %983 = vmatprep.subr.bf16.mxu0 0
        %984 = vmatpush1.bf16.xpose.msra.mxu0 0
        %985 = vmatprep.subr.bf16.mxu0 0
        %986 = vmatpush1.bf16.xpose.msra.mxu0 0
        %987 = vmatprep.subr.bf16.mxu0 0
        %988 = vmatpush1.bf16.xpose.msra.mxu0 0
        %989 = vmatprep.subr.bf16.mxu0 0
        %990 = vmatpush1.bf16.xpose.msra.mxu0 0
        %991 = vmatprep.subr.bf16.mxu0 0
        %992 = vmatpush1.bf16.xpose.msra.mxu0 0
        %993 = vmatprep.subr.bf16.mxu0 0
        %994 = vmatpush1.bf16.xpose.msra.mxu0 0
        %995 = vmatprep.subr.bf16.mxu0 0
        %996 = vmatpush1.bf16.xpose.msra.mxu0 0
        %997 = vmatprep.subr.bf16.mxu0 0
        %998 = vmatpush1.bf16.xpose.msra.mxu0 0
        %999 = vmatprep.mubr.bf16.mxu0 0
        %1000 = vmatmul.mubr.bf16.gmra.mrb[0].mxu0 %v962
        %v1001 = vpop.f32.mrb[0].mxu0
        %v1002 = vadd.f32 0.0, %v1001
        %v1003 = vpop.f32.mrb[0].mxu0
        %v1004 = vpop.f32.mrb[0].mxu0
        %v1005 = vpop.f32.mrb[0].mxu0
        %1006 = vdwg.mxu0
        %1007 = vrot.lane.b32.xlu0 %v854, 96
        %v1008 = vpop.permute.xlu0 %1007
        %v1010 = vsel %vm864, %v854, 0
        %v1013 = vsel %vm864, %v1008, 0
        %1015 = vmatprep.subr.bf16.mxu0 0
        %1016 = vmatpush1.bf16.xpose.msra.mxu0 %v1013
        %1017 = vmatprep.subr.bf16.mxu0 0
        %1018 = vmatpush1.bf16.xpose.msra.mxu0 0
        %1019 = vmatprep.subr.bf16.mxu0 0
        %1020 = vmatpush1.bf16.xpose.msra.mxu0 0
        %1021 = vmatprep.subr.bf16.mxu0 0
        %1022 = vmatpush1.bf16.xpose.msra.mxu0 0
        %1023 = vmatprep.subr.bf16.mxu0 0
        %1024 = vmatpush1.bf16.xpose.msra.mxu0 0
        %1025 = vmatprep.subr.bf16.mxu0 0
        %1026 = vmatpush1.bf16.xpose.msra.mxu0 0
        %1027 = vmatprep.subr.bf16.mxu0 0
        %1028 = vmatpush1.bf16.xpose.msra.mxu0 0
        %1029 = vmatprep.subr.bf16.mxu0 0
        %1030 = vmatpush1.bf16.xpose.msra.mxu0 0
        %1031 = vmatprep.subr.bf16.mxu0 0
        %1032 = vmatpush1.bf16.xpose.msra.mxu0 0
        %1033 = vmatprep.subr.bf16.mxu0 0
        %1034 = vmatpush1.bf16.xpose.msra.mxu0 0
        %1035 = vmatprep.subr.bf16.mxu0 0
        %1036 = vmatpush1.bf16.xpose.msra.mxu0 0
        %1037 = vmatprep.subr.bf16.mxu0 0
        %1038 = vmatpush1.bf16.xpose.msra.mxu0 0
        %1039 = vmatprep.subr.bf16.mxu0 0
        %1040 = vmatpush1.bf16.xpose.msra.mxu0 0
        %1041 = vmatprep.subr.bf16.mxu0 0
        %1042 = vmatpush1.bf16.xpose.msra.mxu0 0
        %1043 = vmatprep.subr.bf16.mxu0 0
        %1044 = vmatpush1.bf16.xpose.msra.mxu0 0
        %1045 = vmatprep.subr.bf16.mxu0 0
        %1046 = vmatpush1.bf16.xpose.msra.mxu0 0
        %1047 = vmatprep.mubr.bf16.mxu0 0
        %1048 = vmatmul.mubr.bf16.gmra.mrb[0].mxu0 %v1010
        %v1049 = vpop.f32.mrb[0].mxu0
        %v1050 = vadd.f32 0.0, %v1049
        %v1051 = vpop.f32.mrb[0].mxu0
        %v1052 = vpop.f32.mrb[0].mxu0
        %v1053 = vpop.f32.mrb[0].mxu0
        %1054 = vdwg.mxu0
        %1055 = vrot.lane.b32.xlu0 %v855, 96
        %v1056 = vpop.permute.xlu0 %1055
        %v1058 = vsel %vm864, %v855, 0
        %v1061 = vsel %vm864, %v1056, 0
        %1063 = vmatprep.subr.bf16.mxu0 0
        %1064 = vmatpush1.bf16.xpose.msra.mxu0 %v1061
        %1065 = vmatprep.subr.bf16.mxu0 0
        %1066 = vmatpush1.bf16.xpose.msra.mxu0 0
        %1067 = vmatprep.subr.bf16.mxu0 0
        %1068 = vmatpush1.bf16.xpose.msra.mxu0 0
        %1069 = vmatprep.subr.bf16.mxu0 0
        %1070 = vmatpush1.bf16.xpose.msra.mxu0 0
        %1071 = vmatprep.subr.bf16.mxu0 0
        %1072 = vmatpush1.bf16.xpose.msra.mxu0 0
        %1073 = vmatprep.subr.bf16.mxu0 0
        %1074 = vmatpush1.bf16.xpose.msra.mxu0 0
        %1075 = vmatprep.subr.bf16.mxu0 0
        %1076 = vmatpush1.bf16.xpose.msra.mxu0 0
        %1077 = vmatprep.subr.bf16.mxu0 0
        %1078 = vmatpush1.bf16.xpose.msra.mxu0 0
        %1079 = vmatprep.subr.bf16.mxu0 0
        %1080 = vmatpush1.bf16.xpose.msra.mxu0 0
        %1081 = vmatprep.subr.bf16.mxu0 0
        %1082 = vmatpush1.bf16.xpose.msra.mxu0 0
        %1083 = vmatprep.subr.bf16.mxu0 0
        %1084 = vmatpush1.bf16.xpose.msra.mxu0 0
        %1085 = vmatprep.subr.bf16.mxu0 0
        %1086 = vmatpush1.bf16.xpose.msra.mxu0 0
        %1087 = vmatprep.subr.bf16.mxu0 0
        %1088 = vmatpush1.bf16.xpose.msra.mxu0 0
        %1089 = vmatprep.subr.bf16.mxu0 0
        %1090 = vmatpush1.bf16.xpose.msra.mxu0 0
        %1091 = vmatprep.subr.bf16.mxu0 0
        %1092 = vmatpush1.bf16.xpose.msra.mxu0 0
        %1093 = vmatprep.subr.bf16.mxu0 0
        %1094 = vmatpush1.bf16.xpose.msra.mxu0 0
        %1095 = vmatprep.mubr.bf16.mxu0 0
        %1096 = vmatmul.mubr.bf16.gmra.mrb[0].mxu0 %v1058
        %v1097 = vpop.f32.mrb[0].mxu0
        %v1098 = vadd.f32 0.0, %v1097
        %v1099 = vpop.f32.mrb[0].mxu0
        %v1100 = vpop.f32.mrb[0].mxu0
        %v1101 = vpop.f32.mrb[0].mxu0
        %1102 = vdwg.mxu0
        %1103 = vrot.lane.b32.xlu0 %v857, 96
        %v1104 = vpop.permute.xlu0 %1103
        %v1106 = vsel %vm864, %v857, 0
        %v1109 = vsel %vm864, %v1104, 0
        %1111 = vmatprep.subr.bf16.mxu0 0
        %1112 = vmatpush1.bf16.xpose.msra.mxu0 %v1109
        %1113 = vmatprep.subr.bf16.mxu0 0
        %1114 = vmatpush1.bf16.xpose.msra.mxu0 0
        %1115 = vmatprep.subr.bf16.mxu0 0
        %1116 = vmatpush1.bf16.xpose.msra.mxu0 0
        %1117 = vmatprep.subr.bf16.mxu0 0
        %1118 = vmatpush1.bf16.xpose.msra.mxu0 0
        %1119 = vmatprep.subr.bf16.mxu0 0
        %1120 = vmatpush1.bf16.xpose.msra.mxu0 0
        %1121 = vmatprep.subr.bf16.mxu0 0
        %1122 = vmatpush1.bf16.xpose.msra.mxu0 0
        %1123 = vmatprep.subr.bf16.mxu0 0
        %1124 = vmatpush1.bf16.xpose.msra.mxu0 0
        %1125 = vmatprep.subr.bf16.mxu0 0
        %1126 = vmatpush1.bf16.xpose.msra.mxu0 0
        %1127 = vmatprep.subr.bf16.mxu0 0
        %1128 = vmatpush1.bf16.xpose.msra.mxu0 0
        %1129 = vmatprep.subr.bf16.mxu0 0
        %1130 = vmatpush1.bf16.xpose.msra.mxu0 0
        %1131 = vmatprep.subr.bf16.mxu0 0
        %1132 = vmatpush1.bf16.xpose.msra.mxu0 0
        %1133 = vmatprep.subr.bf16.mxu0 0
        %1134 = vmatpush1.bf16.xpose.msra.mxu0 0
        %1135 = vmatprep.subr.bf16.mxu0 0
        %1136 = vmatpush1.bf16.xpose.msra.mxu0 0
        %1137 = vmatprep.subr.bf16.mxu0 0
        %1138 = vmatpush1.bf16.xpose.msra.mxu0 0
        %1139 = vmatprep.subr.bf16.mxu0 0
        %1140 = vmatpush1.bf16.xpose.msra.mxu0 0
        %1141 = vmatprep.subr.bf16.mxu0 0
        %1142 = vmatpush1.bf16.xpose.msra.mxu0 0
        %1143 = vmatprep.mubr.bf16.mxu0 0
        %1144 = vmatmul.mubr.bf16.gmra.mrb[0].mxu0 %v1106
        %v1145 = vpop.f32.mrb[0].mxu0
        %v1146 = vadd.f32 0.0, %v1145
        %v1147 = vpop.f32.mrb[0].mxu0
        %v1148 = vpop.f32.mrb[0].mxu0
        %v1149 = vpop.f32.mrb[0].mxu0
        %1150 = vdwg.mxu0
        %1151 = vrot.lane.b32.xlu0 %v859, 96
        %v1152 = vpop.permute.xlu0 %1151
        %v1154 = vsel %vm864, %v859, 0
        %v1157 = vsel %vm864, %v1152, 0
        %1159 = vmatprep.subr.bf16.mxu0 0
        %1160 = vmatpush1.bf16.xpose.msra.mxu0 %v1157
        %1161 = vmatprep.subr.bf16.mxu0 0
        %1162 = vmatpush1.bf16.xpose.msra.mxu0 0
        %1163 = vmatprep.subr.bf16.mxu0 0
        %1164 = vmatpush1.bf16.xpose.msra.mxu0 0
        %1165 = vmatprep.subr.bf16.mxu0 0
        %1166 = vmatpush1.bf16.xpose.msra.mxu0 0
        %1167 = vmatprep.subr.bf16.mxu0 0
        %1168 = vmatpush1.bf16.xpose.msra.mxu0 0
        %1169 = vmatprep.subr.bf16.mxu0 0
        %1170 = vmatpush1.bf16.xpose.msra.mxu0 0
        %1171 = vmatprep.subr.bf16.mxu0 0
        %1172 = vmatpush1.bf16.xpose.msra.mxu0 0
        %1173 = vmatprep.subr.bf16.mxu0 0
        %1174 = vmatpush1.bf16.xpose.msra.mxu0 0
        %1175 = vmatprep.subr.bf16.mxu0 0
        %1176 = vmatpush1.bf16.xpose.msra.mxu0 0
        %1177 = vmatprep.subr.bf16.mxu0 0
        %1178 = vmatpush1.bf16.xpose.msra.mxu0 0
        %1179 = vmatprep.subr.bf16.mxu0 0
        %1180 = vmatpush1.bf16.xpose.msra.mxu0 0
        %1181 = vmatprep.subr.bf16.mxu0 0
        %1182 = vmatpush1.bf16.xpose.msra.mxu0 0
        %1183 = vmatprep.subr.bf16.mxu0 0
        %1184 = vmatpush1.bf16.xpose.msra.mxu0 0
        %1185 = vmatprep.subr.bf16.mxu0 0
        %1186 = vmatpush1.bf16.xpose.msra.mxu0 0
        %1187 = vmatprep.subr.bf16.mxu0 0
        %1188 = vmatpush1.bf16.xpose.msra.mxu0 0
        %1189 = vmatprep.subr.bf16.mxu0 0
        %1190 = vmatpush1.bf16.xpose.msra.mxu0 0
        %1191 = vmatprep.mubr.bf16.mxu0 0
        %1192 = vmatmul.mubr.bf16.gmra.mrb[0].mxu0 %v1154
        %v1193 = vpop.f32.mrb[0].mxu0
        %v1194 = vadd.f32 0.0, %v1193
        %v1195 = vpop.f32.mrb[0].mxu0
        %v1196 = vpop.f32.mrb[0].mxu0
        %v1197 = vpop.f32.mrb[0].mxu0
        %1198 = vdwg.mxu0
        %1199 = vrot.lane.b32.xlu0 %v861, 96
        %v1200 = vpop.permute.xlu0 %1199
        %v1202 = vsel %vm864, %v861, 0
        %v1205 = vsel %vm864, %v1200, 0
        %1207 = vmatprep.subr.bf16.mxu0 0
        %1208 = vmatpush1.bf16.xpose.msra.mxu0 %v1205
        %1209 = vmatprep.subr.bf16.mxu0 0
        %1210 = vmatpush1.bf16.xpose.msra.mxu0 0
        %1211 = vmatprep.subr.bf16.mxu0 0
        %1212 = vmatpush1.bf16.xpose.msra.mxu0 0
        %1213 = vmatprep.subr.bf16.mxu0 0
        %1214 = vmatpush1.bf16.xpose.msra.mxu0 0
        %1215 = vmatprep.subr.bf16.mxu0 0
        %1216 = vmatpush1.bf16.xpose.msra.mxu0 0
        %1217 = vmatprep.subr.bf16.mxu0 0
        %1218 = vmatpush1.bf16.xpose.msra.mxu0 0
        %1219 = vmatprep.subr.bf16.mxu0 0
        %1220 = vmatpush1.bf16.xpose.msra.mxu0 0
        %1221 = vmatprep.subr.bf16.mxu0 0
        %1222 = vmatpush1.bf16.xpose.msra.mxu0 0
        %1223 = vmatprep.subr.bf16.mxu0 0
        %1224 = vmatpush1.bf16.xpose.msra.mxu0 0
        %1225 = vmatprep.subr.bf16.mxu0 0
        %1226 = vmatpush1.bf16.xpose.msra.mxu0 0
        %1227 = vmatprep.subr.bf16.mxu0 0
        %1228 = vmatpush1.bf16.xpose.msra.mxu0 0
        %1229 = vmatprep.subr.bf16.mxu0 0
        %1230 = vmatpush1.bf16.xpose.msra.mxu0 0
        %1231 = vmatprep.subr.bf16.mxu0 0
        %1232 = vmatpush1.bf16.xpose.msra.mxu0 0
        %1233 = vmatprep.subr.bf16.mxu0 0
        %1234 = vmatpush1.bf16.xpose.msra.mxu0 0
        %1235 = vmatprep.subr.bf16.mxu0 0
        %1236 = vmatpush1.bf16.xpose.msra.mxu0 0
        %1237 = vmatprep.subr.bf16.mxu0 0
        %1238 = vmatpush1.bf16.xpose.msra.mxu0 0
        %1239 = vmatprep.mubr.bf16.mxu0 0
        %1240 = vmatmul.mubr.bf16.gmra.mrb[0].mxu0 %v1202
        %v1241 = vpop.f32.mrb[0].mxu0
        %v1242 = vadd.f32 0.0, %v1241
        %v1243 = vpop.f32.mrb[0].mxu0
        %v1244 = vpop.f32.mrb[0].mxu0
        %v1245 = vpop.f32.mrb[0].mxu0
        %1246 = vdwg.mxu0
        %v1247 = vsel %vm864, %v906, -inf
        %1248 = vmax.xlane.f32.xlu0 %v1247
        %v1249 = vpop.xlane.xlu0 %1248
        %v1250 = vsel %vm864, %v954, -inf
        %1251 = vmax.xlane.f32.xlu0 %v1250
        %v1252 = vpop.xlane.xlu0 %1251
        %v1253 = vsel %vm864, %v1002, -inf
        %1254 = vmax.xlane.f32.xlu0 %v1253
        %v1255 = vpop.xlane.xlu0 %1254
        %v1256 = vsel %vm864, %v1050, -inf
        %1257 = vmax.xlane.f32.xlu0 %v1256
        %v1258 = vpop.xlane.xlu0 %1257
        %v1259 = vsel %vm864, %v1098, -inf
        %1260 = vmax.xlane.f32.xlu0 %v1259
        %v1261 = vpop.xlane.xlu0 %1260
        %v1262 = vsel %vm864, %v1146, -inf
        %1263 = vmax.xlane.f32.xlu0 %v1262
        %v1264 = vpop.xlane.xlu0 %1263
        %v1265 = vsel %vm864, %v1194, -inf
        %1266 = vmax.xlane.f32.xlu0 %v1265
        %v1267 = vpop.xlane.xlu0 %1266
        %v1268 = vsel %vm864, %v1242, -inf
        %1269 = vmax.xlane.f32.xlu0 %v1268
        %v1270 = vpop.xlane.xlu0 %1269
        %v1271 = vsub.f32 %v906, %v1249
        %v1272 = vsub.f32 %v954, %v1252
        %v1273 = vsub.f32 %v1002, %v1255
        %v1274 = vsub.f32 %v1050, %v1258
        %v1275 = vsub.f32 %v1098, %v1261
        %v1276 = vsub.f32 %v1146, %v1264
        %v1277 = vsub.f32 %v1194, %v1267
        %v1278 = vsub.f32 %v1242, %v1270
        %v1279 = vmul.f32 %v1271, 1.442695
        %v1280 = vpow.pop %v1279
        %v1281 = vmul.f32 %v1272, 1.442695
        %v1282 = vpow.pop %v1281
        %v1283 = vmul.f32 %v1273, 1.442695
        %v1284 = vpow.pop %v1283
        %v1285 = vmul.f32 %v1274, 1.442695
        %v1286 = vpow.pop %v1285
        %v1287 = vmul.f32 %v1275, 1.442695
        %v1288 = vpow.pop %v1287
        %v1289 = vmul.f32 %v1276, 1.442695
        %v1290 = vpow.pop %v1289
        %v1291 = vmul.f32 %v1277, 1.442695
        %v1292 = vpow.pop %v1291
        %v1293 = vmul.f32 %v1278, 1.442695
        %v1294 = vpow.pop %v1293
        %v1295 = vsel %vm864, %v1280, 0.0
        %1296 = vadd.xlane.f32.xlu0 %v1295
        %v1297 = vpop.xlane.xlu0 %1296
        %v1298 = vsel %vm864, %v1282, 0.0
        %1299 = vadd.xlane.f32.xlu0 %v1298
        %v1300 = vpop.xlane.xlu0 %1299
        %v1301 = vsel %vm864, %v1284, 0.0
        %1302 = vadd.xlane.f32.xlu0 %v1301
        %v1303 = vpop.xlane.xlu0 %1302
        %v1304 = vsel %vm864, %v1286, 0.0
        %1305 = vadd.xlane.f32.xlu0 %v1304
        %v1306 = vpop.xlane.xlu0 %1305
        %v1307 = vsel %vm864, %v1288, 0.0
        %1308 = vadd.xlane.f32.xlu0 %v1307
        %v1309 = vpop.xlane.xlu0 %1308
        %v1310 = vsel %vm864, %v1290, 0.0
        %1311 = vadd.xlane.f32.xlu0 %v1310
        %v1312 = vpop.xlane.xlu0 %1311
        %v1313 = vsel %vm864, %v1292, 0.0
        %1314 = vadd.xlane.f32.xlu0 %v1313
        %v1315 = vpop.xlane.xlu0 %1314
        %v1316 = vsel %vm864, %v1294, 0.0
        %1317 = vadd.xlane.f32.xlu0 %v1316
        %v1318 = vpop.xlane.xlu0 %1317
        %v1319 = vrcp.pop %v1297
        %v1320 = vrcp.pop %v1300
        %v1321 = vrcp.pop %v1303
        %v1322 = vrcp.pop %v1306
        %v1323 = vrcp.pop %v1309
        %v1324 = vrcp.pop %v1312
        %v1325 = vrcp.pop %v1315
        %v1326 = vrcp.pop %v1318
        %v1327 = vmul.f32 %v1280, %v1319
        %v1328 = vmul.f32 %v1282, %v1320
        %v1329 = vmul.f32 %v1284, %v1321
        %v1330 = vmul.f32 %v1286, %v1322
        %v1331 = vmul.f32 %v1288, %v1323
        %v1332 = vmul.f32 %v1290, %v1324
        %v1333 = vmul.f32 %v1292, %v1325
        %v1334 = vmul.f32 %v1294, %v1326
        %v1335 = vpack.c.bf16 %v1327, %v1327
        %v1336 = vpack.c.bf16 %v1328, %v1328
        %v1337 = vpack.c.bf16 %v1329, %v1329
        %v1338 = vpack.c.bf16 %v1330, %v1330
        %v1339 = vpack.c.bf16 %v1331, %v1331
        %v1340 = vpack.c.bf16 %v1332, %v1332
        %v1341 = vpack.c.bf16 %v1333, %v1333
        %v1342 = vpack.c.bf16 %v1334, %v1334
        %1343 = vrot.lane.b32.xlu0 %v847, 64
        %v1344 = vpop.permute.xlu0 %1343
        %v1346 = vsel %vm864, %v1335, 0
        %vm1348 = vcmask 1043456
        %v1350 = vsel %vm1348, %v1344, 0
        %1352 = vmatprep.subr.bf16.mxu0 0
        %1353 = vmatpush1.bf16.msra.mxu0 %v1350
        %1354 = vmatprep.subr.bf16.mxu0 0
        %1355 = vmatpush1.bf16.msra.mxu0 0
        %1356 = vmatprep.subr.bf16.mxu0 0
        %1357 = vmatpush1.bf16.msra.mxu0 0
        %1358 = vmatprep.subr.bf16.mxu0 0
        %1359 = vmatpush1.bf16.msra.mxu0 0
        %1360 = vmatprep.subr.bf16.mxu0 0
        %1361 = vmatpush1.bf16.msra.mxu0 0
        %1362 = vmatprep.subr.bf16.mxu0 0
        %1363 = vmatpush1.bf16.msra.mxu0 0
        %1364 = vmatprep.subr.bf16.mxu0 0
        %1365 = vmatpush1.bf16.msra.mxu0 0
        %1366 = vmatprep.subr.bf16.mxu0 0
        %1367 = vmatpush1.bf16.msra.mxu0 0
        %1368 = vmatprep.subr.bf16.mxu0 0
        %1369 = vmatpush1.bf16.msra.mxu0 0
        %1370 = vmatprep.subr.bf16.mxu0 0
        %1371 = vmatpush1.bf16.msra.mxu0 0
        %1372 = vmatprep.subr.bf16.mxu0 0
        %1373 = vmatpush1.bf16.msra.mxu0 0
        %1374 = vmatprep.subr.bf16.mxu0 0
        %1375 = vmatpush1.bf16.msra.mxu0 0
        %1376 = vmatprep.subr.bf16.mxu0 0
        %1377 = vmatpush1.bf16.msra.mxu0 0
        %1378 = vmatprep.subr.bf16.mxu0 0
        %1379 = vmatpush1.bf16.msra.mxu0 0
        %1380 = vmatprep.subr.bf16.mxu0 0
        %1381 = vmatpush1.bf16.msra.mxu0 0
        %1382 = vmatprep.subr.bf16.mxu0 0
        %1383 = vmatpush1.bf16.msra.mxu0 0
        %1384 = vmatprep.mubr.bf16.mxu0 0
        %1385 = vmatmul.mubr.bf16.gmra.mrb[0].mxu0 %v1346
        %v1386 = vpop.f32.mrb[0].mxu0
        %v1387 = vadd.f32 0.0, %v1386
        %v1388 = vpop.f32.mrb[0].mxu0
        %v1389 = vpop.f32.mrb[0].mxu0
        %v1390 = vpop.f32.mrb[0].mxu0
        %1391 = vdwg.mxu0
        %1392 = vrot.lane.b32.xlu0 %v850, 64
        %v1393 = vpop.permute.xlu0 %1392
        %v1395 = vsel %vm864, %v1336, 0
        %v1398 = vsel %vm1348, %v1393, 0
        %1400 = vmatprep.subr.bf16.mxu0 0
        %1401 = vmatpush1.bf16.msra.mxu0 %v1398
        %1402 = vmatprep.subr.bf16.mxu0 0
        %1403 = vmatpush1.bf16.msra.mxu0 0
        %1404 = vmatprep.subr.bf16.mxu0 0
        %1405 = vmatpush1.bf16.msra.mxu0 0
        %1406 = vmatprep.subr.bf16.mxu0 0
        %1407 = vmatpush1.bf16.msra.mxu0 0
        %1408 = vmatprep.subr.bf16.mxu0 0
        %1409 = vmatpush1.bf16.msra.mxu0 0
        %1410 = vmatprep.subr.bf16.mxu0 0
        %1411 = vmatpush1.bf16.msra.mxu0 0
        %1412 = vmatprep.subr.bf16.mxu0 0
        %1413 = vmatpush1.bf16.msra.mxu0 0
        %1414 = vmatprep.subr.bf16.mxu0 0
        %1415 = vmatpush1.bf16.msra.mxu0 0
        %1416 = vmatprep.subr.bf16.mxu0 0
        %1417 = vmatpush1.bf16.msra.mxu0 0
        %1418 = vmatprep.subr.bf16.mxu0 0
        %1419 = vmatpush1.bf16.msra.mxu0 0
        %1420 = vmatprep.subr.bf16.mxu0 0
        %1421 = vmatpush1.bf16.msra.mxu0 0
        %1422 = vmatprep.subr.bf16.mxu0 0
        %1423 = vmatpush1.bf16.msra.mxu0 0
        %1424 = vmatprep.subr.bf16.mxu0 0
        %1425 = vmatpush1.bf16.msra.mxu0 0
        %1426 = vmatprep.subr.bf16.mxu0 0
        %1427 = vmatpush1.bf16.msra.mxu0 0
        %1428 = vmatprep.subr.bf16.mxu0 0
        %1429 = vmatpush1.bf16.msra.mxu0 0
        %1430 = vmatprep.subr.bf16.mxu0 0
        %1431 = vmatpush1.bf16.msra.mxu0 0
        %1432 = vmatprep.mubr.bf16.mxu0 0
        %1433 = vmatmul.mubr.bf16.gmra.mrb[0].mxu0 %v1395
        %v1434 = vpop.f32.mrb[0].mxu0
        %v1435 = vadd.f32 0.0, %v1434
        %v1436 = vpop.f32.mrb[0].mxu0
        %v1437 = vpop.f32.mrb[0].mxu0
        %v1438 = vpop.f32.mrb[0].mxu0
        %1439 = vdwg.mxu0
        %1440 = vrot.lane.b32.xlu0 %v852, 64
        %v1441 = vpop.permute.xlu0 %1440
        %v1443 = vsel %vm864, %v1337, 0
        %v1446 = vsel %vm1348, %v1441, 0
        %1448 = vmatprep.subr.bf16.mxu0 0
        %1449 = vmatpush1.bf16.msra.mxu0 %v1446
        %1450 = vmatprep.subr.bf16.mxu0 0
        %1451 = vmatpush1.bf16.msra.mxu0 0
        %1452 = vmatprep.subr.bf16.mxu0 0
        %1453 = vmatpush1.bf16.msra.mxu0 0
        %1454 = vmatprep.subr.bf16.mxu0 0
        %1455 = vmatpush1.bf16.msra.mxu0 0
        %1456 = vmatprep.subr.bf16.mxu0 0
        %1457 = vmatpush1.bf16.msra.mxu0 0
        %1458 = vmatprep.subr.bf16.mxu0 0
        %1459 = vmatpush1.bf16.msra.mxu0 0
        %1460 = vmatprep.subr.bf16.mxu0 0
        %1461 = vmatpush1.bf16.msra.mxu0 0
        %1462 = vmatprep.subr.bf16.mxu0 0
        %1463 = vmatpush1.bf16.msra.mxu0 0
        %1464 = vmatprep.subr.bf16.mxu0 0
        %1465 = vmatpush1.bf16.msra.mxu0 0
        %1466 = vmatprep.subr.bf16.mxu0 0
        %1467 = vmatpush1.bf16.msra.mxu0 0
        %1468 = vmatprep.subr.bf16.mxu0 0
        %1469 = vmatpush1.bf16.msra.mxu0 0
        %1470 = vmatprep.subr.bf16.mxu0 0
        %1471 = vmatpush1.bf16.msra.mxu0 0
        %1472 = vmatprep.subr.bf16.mxu0 0
        %1473 = vmatpush1.bf16.msra.mxu0 0
        %1474 = vmatprep.subr.bf16.mxu0 0
        %1475 = vmatpush1.bf16.msra.mxu0 0
        %1476 = vmatprep.subr.bf16.mxu0 0
        %1477 = vmatpush1.bf16.msra.mxu0 0
        %1478 = vmatprep.subr.bf16.mxu0 0
        %1479 = vmatpush1.bf16.msra.mxu0 0
        %1480 = vmatprep.mubr.bf16.mxu0 0
        %1481 = vmatmul.mubr.bf16.gmra.mrb[0].mxu0 %v1443
        %v1482 = vpop.f32.mrb[0].mxu0
        %v1483 = vadd.f32 0.0, %v1482
        %v1484 = vpop.f32.mrb[0].mxu0
        %v1485 = vpop.f32.mrb[0].mxu0
        %v1486 = vpop.f32.mrb[0].mxu0
        %1487 = vdwg.mxu0
        %1488 = vrot.lane.b32.xlu0 %v854, 64
        %v1489 = vpop.permute.xlu0 %1488
        %v1491 = vsel %vm864, %v1338, 0
        %v1494 = vsel %vm1348, %v1489, 0
        %1496 = vmatprep.subr.bf16.mxu0 0
        %1497 = vmatpush1.bf16.msra.mxu0 %v1494
        %1498 = vmatprep.subr.bf16.mxu0 0
        %1499 = vmatpush1.bf16.msra.mxu0 0
        %1500 = vmatprep.subr.bf16.mxu0 0
        %1501 = vmatpush1.bf16.msra.mxu0 0
        %1502 = vmatprep.subr.bf16.mxu0 0
        %1503 = vmatpush1.bf16.msra.mxu0 0
        %1504 = vmatprep.subr.bf16.mxu0 0
        %1505 = vmatpush1.bf16.msra.mxu0 0
        %1506 = vmatprep.subr.bf16.mxu0 0
        %1507 = vmatpush1.bf16.msra.mxu0 0
        %1508 = vmatprep.subr.bf16.mxu0 0
        %1509 = vmatpush1.bf16.msra.mxu0 0
        %1510 = vmatprep.subr.bf16.mxu0 0
        %1511 = vmatpush1.bf16.msra.mxu0 0
        %1512 = vmatprep.subr.bf16.mxu0 0
        %1513 = vmatpush1.bf16.msra.mxu0 0
        %1514 = vmatprep.subr.bf16.mxu0 0
        %1515 = vmatpush1.bf16.msra.mxu0 0
        %1516 = vmatprep.subr.bf16.mxu0 0
        %1517 = vmatpush1.bf16.msra.mxu0 0
        %1518 = vmatprep.subr.bf16.mxu0 0
        %1519 = vmatpush1.bf16.msra.mxu0 0
        %1520 = vmatprep.subr.bf16.mxu0 0
        %1521 = vmatpush1.bf16.msra.mxu0 0
        %1522 = vmatprep.subr.bf16.mxu0 0
        %1523 = vmatpush1.bf16.msra.mxu0 0
        %1524 = vmatprep.subr.bf16.mxu0 0
        %1525 = vmatpush1.bf16.msra.mxu0 0
        %1526 = vmatprep.subr.bf16.mxu0 0
        %1527 = vmatpush1.bf16.msra.mxu0 0
        %1528 = vmatprep.mubr.bf16.mxu0 0
        %1529 = vmatmul.mubr.bf16.gmra.mrb[0].mxu0 %v1491
        %v1530 = vpop.f32.mrb[0].mxu0
        %v1531 = vadd.f32 0.0, %v1530
        %v1532 = vpop.f32.mrb[0].mxu0
        %v1533 = vpop.f32.mrb[0].mxu0
        %v1534 = vpop.f32.mrb[0].mxu0
        %1535 = vdwg.mxu0
        %1536 = vrot.lane.b32.xlu0 %v855, 64
        %v1537 = vpop.permute.xlu0 %1536
        %v1539 = vsel %vm864, %v1339, 0
        %v1542 = vsel %vm1348, %v1537, 0
        %1544 = vmatprep.subr.bf16.mxu0 0
        %1545 = vmatpush1.bf16.msra.mxu0 %v1542
        %1546 = vmatprep.subr.bf16.mxu0 0
        %1547 = vmatpush1.bf16.msra.mxu0 0
        %1548 = vmatprep.subr.bf16.mxu0 0
        %1549 = vmatpush1.bf16.msra.mxu0 0
        %1550 = vmatprep.subr.bf16.mxu0 0
        %1551 = vmatpush1.bf16.msra.mxu0 0
        %1552 = vmatprep.subr.bf16.mxu0 0
        %1553 = vmatpush1.bf16.msra.mxu0 0
        %1554 = vmatprep.subr.bf16.mxu0 0
        %1555 = vmatpush1.bf16.msra.mxu0 0
        %1556 = vmatprep.subr.bf16.mxu0 0
        %1557 = vmatpush1.bf16.msra.mxu0 0
        %1558 = vmatprep.subr.bf16.mxu0 0
        %1559 = vmatpush1.bf16.msra.mxu0 0
        %1560 = vmatprep.subr.bf16.mxu0 0
        %1561 = vmatpush1.bf16.msra.mxu0 0
        %1562 = vmatprep.subr.bf16.mxu0 0
        %1563 = vmatpush1.bf16.msra.mxu0 0
        %1564 = vmatprep.subr.bf16.mxu0 0
        %1565 = vmatpush1.bf16.msra.mxu0 0
        %1566 = vmatprep.subr.bf16.mxu0 0
        %1567 = vmatpush1.bf16.msra.mxu0 0
        %1568 = vmatprep.subr.bf16.mxu0 0
        %1569 = vmatpush1.bf16.msra.mxu0 0
        %1570 = vmatprep.subr.bf16.mxu0 0
        %1571 = vmatpush1.bf16.msra.mxu0 0
        %1572 = vmatprep.subr.bf16.mxu0 0
        %1573 = vmatpush1.bf16.msra.mxu0 0
        %1574 = vmatprep.subr.bf16.mxu0 0
        %1575 = vmatpush1.bf16.msra.mxu0 0
        %1576 = vmatprep.mubr.bf16.mxu0 0
        %1577 = vmatmul.mubr.bf16.gmra.mrb[0].mxu0 %v1539
        %v1578 = vpop.f32.mrb[0].mxu0
        %v1579 = vadd.f32 0.0, %v1578
        %v1580 = vpop.f32.mrb[0].mxu0
        %v1581 = vpop.f32.mrb[0].mxu0
        %v1582 = vpop.f32.mrb[0].mxu0
        %1583 = vdwg.mxu0
        %1584 = vrot.lane.b32.xlu0 %v857, 64
        %v1585 = vpop.permute.xlu0 %1584
        %v1587 = vsel %vm864, %v1340, 0
        %v1590 = vsel %vm1348, %v1585, 0
        %1592 = vmatprep.subr.bf16.mxu0 0
        %1593 = vmatpush1.bf16.msra.mxu0 %v1590
        %1594 = vmatprep.subr.bf16.mxu0 0
        %1595 = vmatpush1.bf16.msra.mxu0 0
        %1596 = vmatprep.subr.bf16.mxu0 0
        %1597 = vmatpush1.bf16.msra.mxu0 0
        %1598 = vmatprep.subr.bf16.mxu0 0
        %1599 = vmatpush1.bf16.msra.mxu0 0
        %1600 = vmatprep.subr.bf16.mxu0 0
        %1601 = vmatpush1.bf16.msra.mxu0 0
        %1602 = vmatprep.subr.bf16.mxu0 0
        %1603 = vmatpush1.bf16.msra.mxu0 0
        %1604 = vmatprep.subr.bf16.mxu0 0
        %1605 = vmatpush1.bf16.msra.mxu0 0
        %1606 = vmatprep.subr.bf16.mxu0 0
        %1607 = vmatpush1.bf16.msra.mxu0 0
        %1608 = vmatprep.subr.bf16.mxu0 0
        %1609 = vmatpush1.bf16.msra.mxu0 0
        %1610 = vmatprep.subr.bf16.mxu0 0
        %1611 = vmatpush1.bf16.msra.mxu0 0
        %1612 = vmatprep.subr.bf16.mxu0 0
        %1613 = vmatpush1.bf16.msra.mxu0 0
        %1614 = vmatprep.subr.bf16.mxu0 0
        %1615 = vmatpush1.bf16.msra.mxu0 0
        %1616 = vmatprep.subr.bf16.mxu0 0
        %1617 = vmatpush1.bf16.msra.mxu0 0
        %1618 = vmatprep.subr.bf16.mxu0 0
        %1619 = vmatpush1.bf16.msra.mxu0 0
        %1620 = vmatprep.subr.bf16.mxu0 0
        %1621 = vmatpush1.bf16.msra.mxu0 0
        %1622 = vmatprep.subr.bf16.mxu0 0
        %1623 = vmatpush1.bf16.msra.mxu0 0
        %1624 = vmatprep.mubr.bf16.mxu0 0
        %1625 = vmatmul.mubr.bf16.gmra.mrb[0].mxu0 %v1587
        %v1626 = vpop.f32.mrb[0].mxu0
        %v1627 = vadd.f32 0.0, %v1626
        %v1628 = vpop.f32.mrb[0].mxu0
        %v1629 = vpop.f32.mrb[0].mxu0
        %v1630 = vpop.f32.mrb[0].mxu0
        %1631 = vdwg.mxu0
        %1632 = vrot.lane.b32.xlu0 %v859, 64
        %v1633 = vpop.permute.xlu0 %1632
        %v1635 = vsel %vm864, %v1341, 0
        %v1638 = vsel %vm1348, %v1633, 0
        %1640 = vmatprep.subr.bf16.mxu0 0
        %1641 = vmatpush1.bf16.msra.mxu0 %v1638
        %1642 = vmatprep.subr.bf16.mxu0 0
        %1643 = vmatpush1.bf16.msra.mxu0 0
        %1644 = vmatprep.subr.bf16.mxu0 0
        %1645 = vmatpush1.bf16.msra.mxu0 0
        %1646 = vmatprep.subr.bf16.mxu0 0
        %1647 = vmatpush1.bf16.msra.mxu0 0
        %1648 = vmatprep.subr.bf16.mxu0 0
        %1649 = vmatpush1.bf16.msra.mxu0 0
        %1650 = vmatprep.subr.bf16.mxu0 0
        %1651 = vmatpush1.bf16.msra.mxu0 0
        %1652 = vmatprep.subr.bf16.mxu0 0
        %1653 = vmatpush1.bf16.msra.mxu0 0
        %1654 = vmatprep.subr.bf16.mxu0 0
        %1655 = vmatpush1.bf16.msra.mxu0 0
        %1656 = vmatprep.subr.bf16.mxu0 0
        %1657 = vmatpush1.bf16.msra.mxu0 0
        %1658 = vmatprep.subr.bf16.mxu0 0
        %1659 = vmatpush1.bf16.msra.mxu0 0
        %1660 = vmatprep.subr.bf16.mxu0 0
        %1661 = vmatpush1.bf16.msra.mxu0 0
        %1662 = vmatprep.subr.bf16.mxu0 0
        %1663 = vmatpush1.bf16.msra.mxu0 0
        %1664 = vmatprep.subr.bf16.mxu0 0
        %1665 = vmatpush1.bf16.msra.mxu0 0
        %1666 = vmatprep.subr.bf16.mxu0 0
        %1667 = vmatpush1.bf16.msra.mxu0 0
        %1668 = vmatprep.subr.bf16.mxu0 0
        %1669 = vmatpush1.bf16.msra.mxu0 0
        %1670 = vmatprep.subr.bf16.mxu0 0
        %1671 = vmatpush1.bf16.msra.mxu0 0
        %1672 = vmatprep.mubr.bf16.mxu0 0
        %1673 = vmatmul.mubr.bf16.gmra.mrb[0].mxu0 %v1635
        %v1674 = vpop.f32.mrb[0].mxu0
        %v1675 = vadd.f32 0.0, %v1674
        %v1676 = vpop.f32.mrb[0].mxu0
        %v1677 = vpop.f32.mrb[0].mxu0
        %v1678 = vpop.f32.mrb[0].mxu0
        %1679 = vdwg.mxu0
        %1680 = vrot.lane.b32.xlu0 %v861, 64
        %v1681 = vpop.permute.xlu0 %1680
        %v1683 = vsel %vm864, %v1342, 0
        %v1686 = vsel %vm1348, %v1681, 0
        %1688 = vmatprep.subr.bf16.mxu0 0
        %1689 = vmatpush1.bf16.msra.mxu0 %v1686
        %1690 = vmatprep.subr.bf16.mxu0 0
        %1691 = vmatpush1.bf16.msra.mxu0 0
        %1692 = vmatprep.subr.bf16.mxu0 0
        %1693 = vmatpush1.bf16.msra.mxu0 0
        %1694 = vmatprep.subr.bf16.mxu0 0
        %1695 = vmatpush1.bf16.msra.mxu0 0
        %1696 = vmatprep.subr.bf16.mxu0 0
        %1697 = vmatpush1.bf16.msra.mxu0 0
        %1698 = vmatprep.subr.bf16.mxu0 0
        %1699 = vmatpush1.bf16.msra.mxu0 0
        %1700 = vmatprep.subr.bf16.mxu0 0
        %1701 = vmatpush1.bf16.msra.mxu0 0
        %1702 = vmatprep.subr.bf16.mxu0 0
        %1703 = vmatpush1.bf16.msra.mxu0 0
        %1704 = vmatprep.subr.bf16.mxu0 0
        %1705 = vmatpush1.bf16.msra.mxu0 0
        %1706 = vmatprep.subr.bf16.mxu0 0
        %1707 = vmatpush1.bf16.msra.mxu0 0
        %1708 = vmatprep.subr.bf16.mxu0 0
        %1709 = vmatpush1.bf16.msra.mxu0 0
        %1710 = vmatprep.subr.bf16.mxu0 0
        %1711 = vmatpush1.bf16.msra.mxu0 0
        %1712 = vmatprep.subr.bf16.mxu0 0
        %1713 = vmatpush1.bf16.msra.mxu0 0
        %1714 = vmatprep.subr.bf16.mxu0 0
        %1715 = vmatpush1.bf16.msra.mxu0 0
        %1716 = vmatprep.subr.bf16.mxu0 0
        %1717 = vmatpush1.bf16.msra.mxu0 0
        %1718 = vmatprep.subr.bf16.mxu0 0
        %1719 = vmatpush1.bf16.msra.mxu0 0
        %1720 = vmatprep.mubr.bf16.mxu0 0
        %1721 = vmatmul.mubr.bf16.gmra.mrb[0].mxu0 %v1683
        %v1722 = vpop.f32.mrb[0].mxu0
        %v1723 = vadd.f32 0.0, %v1722
        %v1724 = vpop.f32.mrb[0].mxu0
        %v1725 = vpop.f32.mrb[0].mxu0
        %v1726 = vpop.f32.mrb[0].mxu0
        %1727 = vdwg.mxu0
        %1729 = vrot.lane.b32.xlu0 %v1435, 8
        %v1730 = vpop.permute.xlu0 %1729
        %1733 = vrot.lane.b32.xlu0 %v1483, 16
        %v1734 = vpop.permute.xlu0 %1733
        %1737 = vrot.lane.b32.xlu0 %v1531, 24
        %v1738 = vpop.permute.xlu0 %1737
        %v1740 = vsel %vm864, %v1387, %v1730
        %vm1741 = vcmask 130048
        %v1742 = vsel %vm1741, %v1740, %v1734
        %vm1743 = vcmask 195584
        %v1744 = vsel %vm1743, %v1742, %v1738
        %1746 = vrot.lane.b32.xlu0 %v1627, 8
        %v1747 = vpop.permute.xlu0 %1746
        %1750 = vrot.lane.b32.xlu0 %v1675, 16
        %v1751 = vpop.permute.xlu0 %1750
        %1754 = vrot.lane.b32.xlu0 %v1723, 24
        %v1755 = vpop.permute.xlu0 %1754
        %v1757 = vsel %vm864, %v1579, %v1747
        %v1758 = vsel %vm1741, %v1757, %v1751
        %v1759 = vsel %vm1743, %v1758, %v1755
        %v1760 = vpack.c.bf16 %v1759, %v1744
        %v1761 = vld [vmem:[%s688] sm:$0xf]
        %v1762 = vld [vmem:[%s688 + $0x4] sm:$0xf]
        %v1763 = vld [vmem:[%s688 + $0x8] sm:$0xf]
        %v1764 = vld [vmem:[%s688 + $0xc] sm:$0xf]
        %v1765 = vld [vmem:[%s691] sm:$0x1]
        %v1767 = vlaneseq
        %v1768 = vshrl.u32 %v1767, 7
        %v1769 = vsub.s32 0, %v1768
        %v1770 = vrot.slane %v1765, %v1769
        %v1776 = vunpack.c.l.b16 %v1761
        %v1777 = vunpack.c.l.b16 %v1762
        %v1778 = vunpack.c.l.b16 %v1763
        %v1779 = vunpack.c.l.b16 %v1764
        %v1780 = vpack.c.b16 %v1777, %v1776
        %v1781 = vpack.c.b16 %v1779, %v1778
        %v1785 = vsel %vm735, %v1760, 0
        %1787 = vmatprep.subr.bf16.mxu0 0
        %1788 = vmatpush1.bf16.msra.mxu0 %v1780
        %1789 = vmatprep.subr.bf16.mxu0 0
        %1790 = vmatpush1.bf16.msra.mxu0 %v1781
        %1791 = vmatprep.subr.bf16.mxu0 0
        %1792 = vmatpush1.bf16.msra.mxu0 0
        %1793 = vmatprep.subr.bf16.mxu0 0
        %1794 = vmatpush1.bf16.msra.mxu0 0
        %1795 = vmatprep.subr.bf16.mxu0 0
        %1796 = vmatpush1.bf16.msra.mxu0 0
        %1797 = vmatprep.subr.bf16.mxu0 0
        %1798 = vmatpush1.bf16.msra.mxu0 0
        %1799 = vmatprep.subr.bf16.mxu0 0
        %1800 = vmatpush1.bf16.msra.mxu0 0
        %1801 = vmatprep.subr.bf16.mxu0 0
        %1802 = vmatpush1.bf16.msra.mxu0 0
        %1803 = vmatprep.subr.bf16.mxu0 0
        %1804 = vmatpush1.bf16.msra.mxu0 0
        %1805 = vmatprep.subr.bf16.mxu0 0
        %1806 = vmatpush1.bf16.msra.mxu0 0
        %1807 = vmatprep.subr.bf16.mxu0 0
        %1808 = vmatpush1.bf16.msra.mxu0 0
        %1809 = vmatprep.subr.bf16.mxu0 0
        %1810 = vmatpush1.bf16.msra.mxu0 0
        %1811 = vmatprep.subr.bf16.mxu0 0
        %1812 = vmatpush1.bf16.msra.mxu0 0
        %1813 = vmatprep.subr.bf16.mxu0 0
        %1814 = vmatpush1.bf16.msra.mxu0 0
        %1815 = vmatprep.subr.bf16.mxu0 0
        %1816 = vmatpush1.bf16.msra.mxu0 0
        %1817 = vmatprep.subr.bf16.mxu0 0
        %1818 = vmatpush1.bf16.msra.mxu0 0
        %1819 = vmatprep.mubr.bf16.mxu0 0
        %1820 = vmatmul.mubr.bf16.gmra.mrb[0].mxu0 %v1785
        %v1821 = vpop.f32.mrb[0].mxu0
        %v1822 = vadd.f32 %v1770, %v1821
        %v1823 = vpop.f32.mrb[0].mxu0
        %v1824 = vpop.f32.mrb[0].mxu0
        %v1825 = vadd.f32 %v1770, %v1824
        %v1826 = vpop.f32.mrb[0].mxu0
        %1827 = vdwg.mxu0
        %v1828 = vld [vmem:[%s694] sm:$0x1]
        %v1830 = vlaneseq
        %v1831 = vshrl.u32 %v1830, 7
        %v1832 = vsub.s32 0, %v1831
        %v1833 = vrot.slane %v1828, %v1832
        %v1835 = vmul.f32 %v1833, %v1822
        %v1836 = vmul.f32 %v1833, %v1825
        %v1837 = vadd.f32 %v731, %v1835
        %v1838 = vadd.f32 %v732, %v1836
        %v1839 = vld [vmem:[%s697] sm:$0x1]
        %v1840 = vld [vmem:[%s700] sm:$0x1]
        %v1841 = vsel %vm735, %v1837, 0.0
        %1842 = vadd.xlane.f32.xlu0 %v1841
        %v1843 = vpop.xlane.xlu0 %1842
        %v1844 = vsel %vm735, %v1838, 0.0
        %1845 = vadd.xlane.f32.xlu0 %v1844
        %v1846 = vpop.xlane.xlu0 %1845
        %v1847 = vmul.f32 %v1843, %v742
        %v1848 = vmul.f32 %v1846, %v742
        %v1849 = vsub.f32 %v1837, %v1847
        %v1850 = vsub.f32 %v1838, %v1848
        %v1851 = vmul.f32 %v1849, %v1849
        %v1852 = vmul.f32 %v1850, %v1850
        %v1853 = vsel %vm735, %v1851, 0.0
        %1854 = vadd.xlane.f32.xlu0 %v1853
        %v1855 = vpop.xlane.xlu0 %1854
        %v1856 = vsel %vm735, %v1852, 0.0
        %1857 = vadd.xlane.f32.xlu0 %v1856
        %v1858 = vpop.xlane.xlu0 %1857
        %v1859 = vmul.f32 %v1855, %v742
        %v1860 = vmul.f32 %v1858, %v742
        %v1861 = vadd.f32 %v1859, 1e-12
        %v1862 = vadd.f32 %v1860, 1e-12
        %v1863 = vrsqrt.pop %v1861
        %v1864 = vrsqrt.pop %v1862
        %v1865 = vmul.f32 %v1849, %v1863
        %v1866 = vmul.f32 %v1850, %v1864
        %v1868 = vlaneseq
        %v1869 = vshrl.u32 %v1868, 7
        %v1870 = vsub.s32 0, %v1869
        %v1871 = vrot.slane %v1839, %v1870
        %v1873 = vmul.f32 %v1865, %v1871
        %v1874 = vmul.f32 %v1866, %v1871
        %v1876 = vlaneseq
        %v1877 = vshrl.u32 %v1876, 7
        %v1878 = vsub.s32 0, %v1877
        %v1879 = vrot.slane %v1840, %v1878
        %v1881 = vadd.f32 %v1873, %v1879
        %v1882 = vadd.f32 %v1874, %v1879
        %v1883 = vpack.c.bf16 %v1882, %v1881
        %v1884 = vld [vmem:[%s705] sm:$0xf]
        %v1885 = vld [vmem:[%s705 + $0x4] sm:$0xf]
        %v1886 = vld [vmem:[%s705 + $0x8] sm:$0xf]
        %v1887 = vld [vmem:[%s705 + $0xc] sm:$0xf]
        %v1888 = vld [vmem:[%s708] sm:$0x1]
        %v1890 = vlaneseq
        %v1891 = vshrl.u32 %v1890, 7
        %v1892 = vsub.s32 0, %v1891
        %v1893 = vrot.slane %v1888, %v1892
        %v1899 = vunpack.c.l.b16 %v1884
        %v1900 = vunpack.c.l.b16 %v1885
        %v1901 = vunpack.c.l.b16 %v1886
        %v1902 = vunpack.c.l.b16 %v1887
        %v1903 = vpack.c.b16 %v1900, %v1899
        %v1904 = vpack.c.b16 %v1902, %v1901
        %v1908 = vsel %vm735, %v1883, 0
        %1910 = vmatprep.subr.bf16.mxu0 0
        %1911 = vmatpush1.bf16.msra.mxu0 %v1903
        %1912 = vmatprep.subr.bf16.mxu0 0
        %1913 = vmatpush1.bf16.msra.mxu0 %v1904
        %1914 = vmatprep.subr.bf16.mxu0 0
        %1915 = vmatpush1.bf16.msra.mxu0 0
        %1916 = vmatprep.subr.bf16.mxu0 0
        %1917 = vmatpush1.bf16.msra.mxu0 0
        %1918 = vmatprep.subr.bf16.mxu0 0
        %1919 = vmatpush1.bf16.msra.mxu0 0
        %1920 = vmatprep.subr.bf16.mxu0 0
        %1921 = vmatpush1.bf16.msra.mxu0 0
        %1922 = vmatprep.subr.bf16.mxu0 0
        %1923 = vmatpush1.bf16.msra.mxu0 0
        %1924 = vmatprep.subr.bf16.mxu0 0
        %1925 = vmatpush1.bf16.msra.mxu0 0
        %1926 = vmatprep.subr.bf16.mxu0 0
        %1927 = vmatpush1.bf16.msra.mxu0 0
        %1928 = vmatprep.subr.bf16.mxu0 0
        %1929 = vmatpush1.bf16.msra.mxu0 0
        %1930 = vmatprep.subr.bf16.mxu0 0
        %1931 = vmatpush1.bf16.msra.mxu0 0
        %1932 = vmatprep.subr.bf16.mxu0 0
        %1933 = vmatpush1.bf16.msra.mxu0 0
        %1934 = vmatprep.subr.bf16.mxu0 0
        %1935 = vmatpush1.bf16.msra.mxu0 0
        %1936 = vmatprep.subr.bf16.mxu0 0
        %1937 = vmatpush1.bf16.msra.mxu0 0
        %1938 = vmatprep.subr.bf16.mxu0 0
        %1939 = vmatpush1.bf16.msra.mxu0 0
        %1940 = vmatprep.subr.bf16.mxu0 0
        %1941 = vmatpush1.bf16.msra.mxu0 0
        %1942 = vmatprep.mubr.bf16.mxu0 0
        %1943 = vmatmul.mubr.bf16.gmra.mrb[0].mxu0 %v1908
        %v1944 = vpop.f32.mrb[0].mxu0
        %v1945 = vadd.f32 %v1893, %v1944
        %v1946 = vpop.f32.mrb[0].mxu0
        %v1947 = vpop.f32.mrb[0].mxu0
        %v1948 = vadd.f32 %v1893, %v1947
        %v1949 = vpop.f32.mrb[0].mxu0
        %1950 = vdwg.mxu0
        %v1951 = vmul.f32 %v1945, %v1945
        %v1952 = vmul.f32 %v1948, %v1948
        %v1953 = vmul.f32 %v1945, %v1951
        %v1954 = vmul.f32 %v1948, %v1952
        %v1955 = vmul.f32 %v1953, 0.044715
        %v1956 = vmul.f32 %v1954, 0.044715
        %v1957 = vadd.f32 %v1945, %v1955
        %v1958 = vadd.f32 %v1948, %v1956
        %v1959 = vmul.f32 %v1957, 0.7978846
        %v1960 = vmul.f32 %v1958, 0.7978846
        %v1961 = vtanh.pop %v1959
        %v1962 = vtanh.pop %v1960
        %v1963 = vadd.f32 %v1961, 1.0
        %v1964 = vadd.f32 %v1962, 1.0
        %v1965 = vmul.f32 %v1963, 0.5
        %v1966 = vmul.f32 %v1964, 0.5
        %v1967 = vmul.f32 %v1945, %v1965
        %v1968 = vmul.f32 %v1948, %v1966
        %v1969 = vpack.c.bf16 %v1968, %v1967
        %v1970 = vld [vmem:[%s713] sm:$0xf]
        %v1971 = vld [vmem:[%s713 + $0x4] sm:$0xf]
        %v1972 = vld [vmem:[%s713 + $0x8] sm:$0xf]
        %v1973 = vld [vmem:[%s713 + $0xc] sm:$0xf]
        %v1974 = vld [vmem:[%s713 + $0x10] sm:$0xf]
        %v1975 = vld [vmem:[%s713 + $0x14] sm:$0xf]
        %v1976 = vld [vmem:[%s713 + $0x18] sm:$0xf]
        %v1977 = vld [vmem:[%s713 + $0x1c] sm:$0xf]
        %v1978 = vld [vmem:[%s713 + $0x20] sm:$0xf]
        %v1979 = vld [vmem:[%s713 + $0x24] sm:$0xf]
        %v1980 = vld [vmem:[%s713 + $0x28] sm:$0xf]
        %v1981 = vld [vmem:[%s713 + $0x2c] sm:$0xf]
        %v1982 = vld [vmem:[%s713 + $0x30] sm:$0xf]
        %v1983 = vld [vmem:[%s713 + $0x34] sm:$0xf]
        %v1984 = vld [vmem:[%s713 + $0x38] sm:$0xf]
        %v1985 = vld [vmem:[%s713 + $0x3c] sm:$0xf]
        %v1986 = vld [vmem:[%s716] sm:$0x1]
        %v1988 = vlaneseq
        %v1989 = vshrl.u32 %v1988, 7
        %v1990 = vsub.s32 0, %v1989
        %v1991 = vrot.slane %v1986, %v1990
        %v2009 = vunpack.c.l.b16 %v1970
        %v2010 = vunpack.c.l.b16 %v1971
        %v2011 = vunpack.c.l.b16 %v1972
        %v2012 = vunpack.c.l.b16 %v1973
        %v2013 = vunpack.c.l.b16 %v1974
        %v2014 = vunpack.c.l.b16 %v1975
        %v2015 = vunpack.c.l.b16 %v1976
        %v2016 = vunpack.c.l.b16 %v1977
        %v2017 = vunpack.c.l.b16 %v1978
        %v2018 = vunpack.c.l.b16 %v1979
        %v2019 = vunpack.c.l.b16 %v1980
        %v2020 = vunpack.c.l.b16 %v1981
        %v2021 = vunpack.c.l.b16 %v1982
        %v2022 = vunpack.c.l.b16 %v1983
        %v2023 = vunpack.c.l.b16 %v1984
        %v2024 = vunpack.c.l.b16 %v1985
        %v2025 = vpack.c.b16 %v2010, %v2009
        %v2026 = vpack.c.b16 %v2012, %v2011
        %v2027 = vpack.c.b16 %v2014, %v2013
        %v2028 = vpack.c.b16 %v2016, %v2015
        %v2029 = vpack.c.b16 %v2018, %v2017
        %v2030 = vpack.c.b16 %v2020, %v2019
        %v2031 = vpack.c.b16 %v2022, %v2021
        %v2032 = vpack.c.b16 %v2024, %v2023
        %2041 = vmatprep.subr.bf16.mxu0 0
        %2042 = vmatpush1.bf16.msra.mxu0 %v2025
        %2043 = vmatprep.subr.bf16.mxu0 0
        %2044 = vmatpush1.bf16.msra.mxu0 %v2026
        %2045 = vmatprep.subr.bf16.mxu0 0
        %2046 = vmatpush1.bf16.msra.mxu0 %v2027
        %2047 = vmatprep.subr.bf16.mxu0 0
        %2048 = vmatpush1.bf16.msra.mxu0 %v2028
        %2049 = vmatprep.subr.bf16.mxu0 0
        %2050 = vmatpush1.bf16.msra.mxu0 %v2029
        %2051 = vmatprep.subr.bf16.mxu0 0
        %2052 = vmatpush1.bf16.msra.mxu0 %v2030
        %2053 = vmatprep.subr.bf16.mxu0 0
        %2054 = vmatpush1.bf16.msra.mxu0 %v2031
        %2055 = vmatprep.subr.bf16.mxu0 0
        %2056 = vmatpush1.bf16.msra.mxu0 %v2032
        %2057 = vmatprep.subr.bf16.mxu0 0
        %2058 = vmatpush1.bf16.msra.mxu0 0
        %2059 = vmatprep.subr.bf16.mxu0 0
        %2060 = vmatpush1.bf16.msra.mxu0 0
        %2061 = vmatprep.subr.bf16.mxu0 0
        %2062 = vmatpush1.bf16.msra.mxu0 0
        %2063 = vmatprep.subr.bf16.mxu0 0
        %2064 = vmatpush1.bf16.msra.mxu0 0
        %2065 = vmatprep.subr.bf16.mxu0 0
        %2066 = vmatpush1.bf16.msra.mxu0 0
        %2067 = vmatprep.subr.bf16.mxu0 0
        %2068 = vmatpush1.bf16.msra.mxu0 0
        %2069 = vmatprep.subr.bf16.mxu0 0
        %2070 = vmatpush1.bf16.msra.mxu0 0
        %2071 = vmatprep.subr.bf16.mxu0 0
        %2072 = vmatpush1.bf16.msra.mxu0 0
        %2073 = vmatprep.mubr.bf16.mxu0 0
        %2074 = vmatmul.mubr.bf16.gmra.mrb[0].mxu0 %v1969
        %v2075 = vpop.f32.mrb[0].mxu0
        %v2076 = vadd.f32 %v1991, %v2075
        %v2077 = vpop.f32.mrb[0].mxu0
        %v2078 = vpop.f32.mrb[0].mxu0
        %v2079 = vadd.f32 %v1991, %v2078
        %v2080 = vpop.f32.mrb[0].mxu0
        %2081 = vdwg.mxu0
        %v2082 = vld [vmem:[%s719] sm:$0x1]
        %v2084 = vlaneseq
        %v2085 = vshrl.u32 %v2084, 7
        %v2086 = vsub.s32 0, %v2085
        %v2087 = vrot.slane %v2082, %v2086
        %v2089 = vmul.f32 %v2087, %v2076
        %v2090 = vmul.f32 %v2087, %v2079
        %v2091 = vadd.f32 %v1837, %v2089
        %v2092 = vadd.f32 %v1838, %v2090
        %2093 = vst.msk [vmem:[#allocation2] sm:$0xff] %vm735, %v2091
        %2094 = vst.msk [vmem:[#allocation2 + $0x8] sm:$0xff] %vm735, %v2092
        // Predicated region
        $region85: #{tpu_custom_call.1} parent=79 // pred_check
          %p2095 = pneg %p447
        $region86: #{tpu_custom_call.1} parent=79 // pred_check_branch
          %2097 = sbr.rel (%p2095) target = $region88
        $region87: #{tpu_custom_call.1} parent=79 // pred_region
          %s2098 = smul.u32 2, %s31
          %s2100 = ssub.s32 256, 256
          %2101 = vsyncadd [#allocation3], %s2100
          %s2102 = smul.addr %s2098, 128
          %s2103 = scalar_lea.hbm %s15, %s2102
          %s2104 = sshll.u32 [#allocation2], 4
          %s2105 = int_to_ptr.vmem [resolvable:$true] %s2104
          %2110 = dma.vmem_to_hbm [thread:$0]  %s2105, 256, %s2103, [#allocation3], 128, 128, 8
        $region88: #{tpu_custom_call.1} parent=79 // pred_fallthru
          _
        // Predicated region
        $region89: #{tpu_custom_call.1} parent=79 // pred_check
          %p2111 = pneg %p447
        $region90: #{tpu_custom_call.1} parent=79 // pred_check_branch
          %2113 = sbr.rel (%p2111) target = $region92
        $region91: #{tpu_custom_call.1} parent=79 // pred_region
          %2114 = dma.done [#allocation3], 256
        $region92: #{tpu_custom_call.1} parent=79 // pred_fallthru
          _
      $region80: #{tpu_custom_call.1} parent=5 // pred_fallthru
        _
      %p2115 = scmp.le.s32.totalorder 2, %s22
      // Predicated region
      $region93: #{tpu_custom_call.1} parent=5 // pred_check
        %p2116 = pneg %p2115
      $region94: #{tpu_custom_call.1} parent=5 // pred_check_branch
        %2118 = sbr.rel (%p2116) target = $region96
      $region95: #{tpu_custom_call.1} parent=5 // pred_region
        %s2119 = ssub.s32 %s22, 2
      $region96: #{tpu_custom_call.1} parent=5 // pred_fallthru
        _
    $region6: #{tpu_custom_call.1} parent=1 // loop_footer
      %s26 = sadd.s32 1, %s22
    $region7: #{tpu_custom_call.1} parent=1 // loop_footer_branch
      %21 = sbr.rel target = $region3
    $region8: #{tpu_custom_call.1} parent=1 // loop_exit
      _
    %2120 = vsyncpa [#allocation3], 1
    %s2121 = scalar_lea.sflag [#allocation3], 1
    %2122 = vsyncpa %s2121, 1

</llo_original>
